<compile_context>
chip_gen: v7x
topology: tpu7x:2x2x1
jax: 0.10.0
libtpu: 0.0.40
codegen_flags: <defaults>
</compile_context>

<pallas_src>
import math

import jax
import jax.numpy as jnp
from jax import lax
from jax.experimental import pallas as pl
from jax.experimental.pallas import tpu as pltpu

MXU_DTYPE = jnp.bfloat16          # MXU operand dtype (accumulation stays f32)
ACT_DTYPE = jnp.bfloat16          # HBM storage dtype for intermediate activations
BN_EPS = 1e-5
VMEM_LIMIT_BYTES = 48 * 1024 * 1024
ROW_TILE_TARGET = 2048            # target flat rows per conv3x3 grid step


def _cparams(*sems):
    return pltpu.CompilerParams(dimension_semantics=sems,
                                vmem_limit_bytes=VMEM_LIMIT_BYTES)


def _pick_tile(m, cands=(8192, 4096, 2048, 1024, 512, 256, 128, 64, 32, 16, 8)):
    """Largest candidate tile that divides m with >=2 grid steps (else full)."""
    for c in cands:
        if m % c == 0 and m // c >= 2:
            return c
    return m


def _pick_row_tile(h, w):
    """Image rows per conv3x3 grid step (halo'd row tiling)."""
    if w % 8 != 0 or h * w <= ROW_TILE_TARGET:
        return h
    for th in range(h, 0, -1):
        if h % th == 0 and th * w <= ROW_TILE_TARGET:
            return th
    return 1


def _finalize_stats(partials, count):
    """[G, 2, C] partial (sum, sumsq) -> [2, C] (mean, rsqrt(var+eps))."""
    s = jnp.sum(partials.astype(jnp.float32), axis=0)
    mean = s[0] / count
    # NOTE: E[x^2]-E[x]^2 in f32; clamped.  Good enough for bf16 activations,
    # a compensated / two-pass reduction would be more robust at huge M.
    var = jnp.maximum(s[1] / count - mean * mean, 0.0)
    rstd = lax.rsqrt(var + BN_EPS)
    return jnp.stack([mean, rstd], axis=0)


# -----------------------------------------------------------------------------
# Standalone stats (only used for bn0 over the raw network input)
# -----------------------------------------------------------------------------
def _input_stats_kernel(x_ref, o_ref):
    x = x_ref[...].astype(jnp.float32)
    o_ref[0] = jnp.concatenate(
        [jnp.sum(x, axis=0, keepdims=True),
         jnp.sum(x * x, axis=0, keepdims=True)], axis=0)


def input_stats(x2d):
    M, C = x2d.shape
    TM = _pick_tile(M)
    g = M // TM
    part = pl.pallas_call(
        _input_stats_kernel,
        out_shape=jax.ShapeDtypeStruct((g, 2, C), jnp.float32),
        grid=(g,),
        in_specs=[pl.BlockSpec((TM, C), lambda i: (i, 0))],
        out_specs=pl.BlockSpec((1, 2, C), lambda i: (i, 0, 0)),
        compiler_params=_cparams("parallel"),
    )(x2d)
    return _finalize_stats(part, M)


# -----------------------------------------------------------------------------
# 3x3 "same" conv: fused prologue, in-kernel zero-padding, tap-concat matmul,
# fused stats epilogue, halo'd row tiling.
# -----------------------------------------------------------------------------
def _make_conv3x3_kernel(W, TH, Cin, tiled, has_bn, has_max, has_prelu,
                         emit_partner):
    Ntile = TH * W
    noff = W + 1          # slab extension (rows) on each side

    def kernel(*refs):
        it = iter(refs)
        x_c = next(it)
        x_t = x_b = None
        if tiled:
            x_t = next(it)
            x_b = next(it)
        p_c = p_t = p_b = None
        if has_max:
            p_c = next(it)
            if tiled:
                p_t = next(it)
                p_b = next(it)
        st = next(it) if has_bn else None
        al = next(it) if has_prelu else None
        w_ref = next(it)
        b_ref = next(it)
        y_ref = next(it)
        stat_ref = next(it)
        po_ref = next(it) if emit_partner else None

        def prologue(xr, pr):
            v = xr[0].astype(jnp.float32)
            if has_bn:
                v = (v - st[0:1, :]) * st[1:2, :]
            if has_max:
                v = jnp.maximum(v, pr[0].astype(jnp.float32))
            return v                       # value *before* PReLU (partner point)

        def act(v):
            if has_prelu:
                a = al[0]
                return jnp.where(v >= 0, v, a * v)
            return v

        xc = prologue(x_c, p_c)
        if emit_partner:
            po_ref[0] = xc.astype(po_ref.dtype)
        xc = act(xc)

        if tiled:
            i = pl.program_id(1)
            top = act(prologue(x_t, p_t)) * (i > 0).astype(jnp.float32)
            bot = act(prologue(x_b, p_b)) * (
                i < pl.num_programs(1) - 1).astype(jnp.float32)
            zrow = jnp.zeros((1, Cin), jnp.float32)
            xext = jnp.concatenate([zrow, top, xc, bot, zrow], axis=0)
        else:
            zpad = jnp.zeros((noff, Cin), jnp.float32)
            xext = jnp.concatenate([zpad, xc, zpad], axis=0)

        # column-wrap masks (output-pixel columns)
        col = lax.broadcasted_iota(jnp.int32, (Ntile, 1), 0) % W
        ok_l = (col > 0).astype(jnp.float32)        # valid for dj == -1
        ok_r = (col < W - 1).astype(jnp.float32)    # valid for dj == +1

        taps = []
        for di in (-1, 0, 1):
            for dj in (-1, 0, 1):
                s = di * W + dj
                xt = xext[noff + s:noff + s + Ntile, :]
                if dj == -1:
                    xt = xt * ok_l
                elif dj == 1:
                    xt = xt * ok_r
                taps.append(xt)
        xcat = jnp.concatenate(taps, axis=1).astype(MXU_DTYPE)   # [Ntile, 9*Cin]
        y = jnp.dot(xcat, w_ref[...],
                    preferred_element_type=jnp.float32) + b_ref[...]
        yb = y.astype(y_ref.dtype)
        y_ref[0] = yb
        yf = yb.astype(jnp.float32)                 # stats consistent w/ storage
        stat_ref[0] = jnp.concatenate(
            [jnp.sum(yf, axis=0, keepdims=True),
             jnp.sum(yf * yf, axis=0, keepdims=True)], axis=0)

    return kernel


def conv3x3(x, w_cat, b, H, W, *, mode=None, stats=None, partner=None,
            alpha=None, emit_partner=False, row_tile=None):
    """x: [B, H*W, Cin] bf16, w_cat: [9*Cin, Cout] bf16.  Returns
    (y, [partner_out,] bn_stats_of_y)."""
    B, N, Cin = x.shape
    Cout = w_cat.shape[-1]
    has_bn = mode in ('bn', 'bn_prelu', 'bn_max_prelu')
    has_max = mode == 'bn_max_prelu'
    has_prelu = mode in ('prelu', 'bn_prelu', 'bn_max_prelu')

    TH = _pick_row_tile(H, W) if row_tile is None else row_tile
    if TH <= 0 or H % TH != 0 or (TH < H and W % 8 != 0):
        TH = H
    nblk = H // TH
    tiled = nblk > 1
    Ntile = TH * W

    b2 = jnp.asarray(b, jnp.float32).reshape(1, Cout)

    def top_map(bb, ii):
        return (bb, jnp.maximum(ii * TH - 1, 0), 0)

    def bot_map(bb, ii):
        return (bb, jnp.minimum((ii + 1) * TH, H - 1), 0)

    in_specs = [pl.BlockSpec((1, Ntile, Cin), lambda bb, ii: (bb, ii, 0))]
    args = [x]
    if tiled:
        in_specs += [pl.BlockSpec((1, W, Cin), top_map),
                     pl.BlockSpec((1, W, Cin), bot_map)]
        args += [x, x]
    if has_max:
        in_specs.append(pl.BlockSpec((1, Ntile, Cin), lambda bb, ii: (bb, ii, 0)))
        args.append(partner)
        if tiled:
            in_specs += [pl.BlockSpec((1, W, Cin), top_map),
                         pl.BlockSpec((1, W, Cin), bot_map)]
            args += [partner, partner]
    if has_bn:
        in_specs.append(pl.BlockSpec((2, Cin), lambda bb, ii: (0, 0)))
        args.append(stats)
    if has_prelu:
        in_specs.append(pl.BlockSpec(memory_space=pltpu.MemorySpace.SMEM))
        args.append(alpha)
    in_specs += [pl.BlockSpec((9 * Cin, Cout), lambda bb, ii: (0, 0)),
                 pl.BlockSpec((1, Cout), lambda bb, ii: (0, 0))]
    args += [w_cat, b2]

    out_shapes = [jax.ShapeDtypeStruct((B, N, Cout), ACT_DTYPE),
                  jax.ShapeDtypeStruct((B * nblk, 2, Cout), jnp.float32)]
    out_specs = [pl.BlockSpec((1, Ntile, Cout), lambda bb, ii: (bb, ii, 0)),
                 pl.BlockSpec((1, 2, Cout),
                              lambda bb, ii: (bb * nblk + ii, 0, 0))]
    if emit_partner:
        out_shapes.append(jax.ShapeDtypeStruct((B, N, Cin), ACT_DTYPE))
        out_specs.append(pl.BlockSpec((1, Ntile, Cin),
                                      lambda bb, ii: (bb, ii, 0)))

    outs = pl.pallas_call(
        _make_conv3x3_kernel(W, TH, Cin, tiled, has_bn, has_max, has_prelu,
                             emit_partner),
        out_shape=tuple(out_shapes),
        grid=(B, nblk),
        in_specs=in_specs,
        out_specs=tuple(out_specs),
        compiler_params=_cparams("parallel", "parallel"),
    )(*args)

    st = _finalize_stats(outs[1], B * N)
    if emit_partner:
        return outs[0], outs[2], st
    return outs[0], st


# -----------------------------------------------------------------------------
# 1x1 conv (tiled matmul) with optional fused BN->maxout->PReLU prologue and
# fused stats epilogue.
# -----------------------------------------------------------------------------
def _make_conv1x1_kernel(has_prologue, want_stats):
    def kernel(*refs):
        it = iter(refs)
        a_ref = next(it)
        p_ref = st_ref = al_ref = None
        if has_prologue:
            p_ref = next(it)
            st_ref = next(it)
            al_ref = next(it)
        w_ref = next(it)
        b_ref = next(it)
        y_ref = next(it)
        stat_ref = next(it) if want_stats else None

        x = a_ref[...].astype(jnp.float32)
        if has_prologue:
            x = (x - st_ref[0:1, :]) * st_ref[1:2, :]
            x = jnp.maximum(x, p_ref[...].astype(jnp.float32))
            a = al_ref[0]
            x = jnp.where(x >= 0, x, a * x)
        y = jnp.dot(x.astype(MXU_DTYPE), w_ref[...],
                    preferred_element_type=jnp.float32) + b_ref[...]
        yb = y.astype(y_ref.dtype)
        y_ref[...] = yb
        if want_stats:
            yf = yb.astype(jnp.float32)
            stat_ref[0] = jnp.concatenate(
                [jnp.sum(yf, axis=0, keepdims=True),
                 jnp.sum(yf * yf, axis=0, keepdims=True)], axis=0)
    return kernel


def conv1x1(a2d, w_io, b, *, stats=None, partner=None, alpha=None,
            want_stats=False, out_dtype=None):
    M, Cin = a2d.shape
    Cout = w_io.shape[-1]
    out_dtype = ACT_DTYPE if out_dtype is None else out_dtype
    has_prologue = stats is not None
    TM = _pick_tile(M)
    g = M // TM
    b2 = jnp.asarray(b, jnp.float32).reshape(1, Cout)

    in_specs = [pl.BlockSpec((TM, Cin), lambda i: (i, 0))]
    args = [a2d]
    if has_prologue:
        in_specs += [pl.BlockSpec((TM, Cin), lambda i: (i, 0)),
                     pl.BlockSpec((2, Cin), lambda i: (0, 0)),
                     pl.BlockSpec(memory_space=pltpu.MemorySpace.SMEM)]
        args += [partner, stats, alpha]
    in_specs += [pl.BlockSpec((Cin, Cout), lambda i: (0, 0)),
                 pl.BlockSpec((1, Cout), lambda i: (0, 0))]
    args += [w_io, b2]

    if want_stats:
        out_shape = (jax.ShapeDtypeStruct((M, Cout), out_dtype),
                     jax.ShapeDtypeStruct((g, 2, Cout), jnp.float32))
        out_specs = (pl.BlockSpec((TM, Cout), lambda i: (i, 0)),
                     pl.BlockSpec((1, 2, Cout), lambda i: (i, 0, 0)))
    else:
        out_shape = jax.ShapeDtypeStruct((M, Cout), out_dtype)
        out_specs = pl.BlockSpec((TM, Cout), lambda i: (i, 0))

    out = pl.pallas_call(
        _make_conv1x1_kernel(has_prologue, want_stats),
        out_shape=out_shape,
        grid=(g,),
        in_specs=in_specs,
        out_specs=out_specs,
        compiler_params=_cparams("parallel"),
    )(*args)
    if want_stats:
        y, part = out
        return y, _finalize_stats(part, M)
    return out


# -----------------------------------------------------------------------------
# Self-attention: fused bn3 + packed Q/K/V projection, then tiled attention
# with bn3-residual recompute and fused bn4-stats epilogue.
# -----------------------------------------------------------------------------
def _qkv_kernel(a_ref, st_ref, w_ref, b_ref, o_ref):
    x = (a_ref[...].astype(jnp.float32) - st_ref[0:1, :]) * st_ref[1:2, :]
    y = jnp.dot(x.astype(MXU_DTYPE), w_ref[...],
                preferred_element_type=jnp.float32) + b_ref[...]
    o_ref[...] = y.astype(o_ref.dtype)


def qkv_project(a2d, stats, w_qkv, b_qkv):
    M, C = a2d.shape
    Ctot = w_qkv.shape[-1]
    TM = _pick_tile(M)
    b2 = jnp.asarray(b_qkv, jnp.float32).reshape(1, Ctot)
    return pl.pallas_call(
        _qkv_kernel,
        out_shape=jax.ShapeDtypeStruct((M, Ctot), ACT_DTYPE),
        grid=(M // TM,),
        in_specs=[pl.BlockSpec((TM, C), lambda i: (i, 0)),
                  pl.BlockSpec((2, C), lambda i: (0, 0)),
                  pl.BlockSpec((C, Ctot), lambda i: (0, 0)),
                  pl.BlockSpec((1, Ctot), lambda i: (0, 0))],
        out_specs=pl.BlockSpec((TM, Ctot), lambda i: (i, 0)),
        compiler_params=_cparams("parallel"),
    )(a2d, stats, w_qkv, b2)


def _make_attn_kernel(C8, C):
    def kernel(q_ref, kv_ref, o_raw_ref, st_ref, g_ref, out_ref, stat_ref):
        q = q_ref[0][:, :C8].astype(MXU_DTYPE)          # [TQ, C8]
        kv = kv_ref[0]                                  # [N, Ctot]
        k = kv[:, C8:2 * C8].astype(MXU_DTYPE)          # [N, C8]
        v = kv[:, 2 * C8:].astype(MXU_DTYPE)            # [N, C]
        energy = lax.dot_general(q, k, (((1,), (1,)), ((), ())),
                                 preferred_element_type=jnp.float32)
        energy = energy - jnp.max(energy, axis=-1, keepdims=True)
        e = jnp.exp(energy)
        att = e * pl.reciprocal(jnp.sum(e, axis=-1, keepdims=True), approx=True)
        out = jnp.dot(att.astype(MXU_DTYPE), v,
                      preferred_element_type=jnp.float32)          # att @ V
        xb = (o_raw_ref[0].astype(jnp.float32) - st_ref[0:1, :]) * st_ref[1:2, :]
        res = g_ref[0] * out + xb
        rb = res.astype(out_ref.dtype)
        out_ref[0] = rb
        rf = rb.astype(jnp.float32)
        stat_ref[0] = jnp.concatenate(
            [jnp.sum(rf, axis=0, keepdims=True),
             jnp.sum(rf * rf, axis=0, keepdims=True)], axis=0)
    return kernel


def attention(qkv, o_raw, stats3, gamma):
    """qkv: [B, N, 2*C8+C] bf16, o_raw: [B, N, C] bf16.  Returns
    (gamma*attn + bn3(o_raw), bn4 stats)."""
    B, N, Ctot = qkv.shape
    C = o_raw.shape[-1]
    C8 = (Ctot - C) // 2
    TQ = _pick_tile(N, (512, 256, 128))
    nq = N // TQ
    # TODO(synk): flash-style online-softmax KV tiling for N >> 4096.
    out, part = pl.pallas_call(
        _make_attn_kernel(C8, C),
        out_shape=(jax.ShapeDtypeStruct((B, N, C), ACT_DTYPE),
                   jax.ShapeDtypeStruct((B * nq, 2, C), jnp.float32)),
        grid=(B, nq),
        in_specs=[pl.BlockSpec((1, TQ, Ctot), lambda b, m: (b, m, 0)),
                  pl.BlockSpec((1, N, Ctot), lambda b, m: (b, 0, 0)),
                  pl.BlockSpec((1, TQ, C), lambda b, m: (b, m, 0)),
                  pl.BlockSpec((2, C), lambda b, m: (0, 0)),
                  pl.BlockSpec(memory_space=pltpu.MemorySpace.SMEM)],
        out_specs=(pl.BlockSpec((1, TQ, C), lambda b, m: (b, m, 0)),
                   pl.BlockSpec((1, 2, C), lambda b, m: (b * nq + m, 0, 0))),
        compiler_params=_cparams("parallel", "parallel"),
    )(qkv, qkv, o_raw, stats3, gamma)
    return out, _finalize_stats(part, B * N)


# -----------------------------------------------------------------------------
# bn4 apply (lane-dense elementwise)
# -----------------------------------------------------------------------------
def _bn_apply_kernel(x_ref, st_ref, o_ref):
    v = (x_ref[...].astype(jnp.float32) - st_ref[0:1, :]) * st_ref[1:2, :]
    o_ref[...] = v.astype(o_ref.dtype)


def bn_apply(x2d, stats):
    M, C = x2d.shape
    fold = 1
    if C <= 128 and 128 % C == 0 and M % (128 // C) == 0:
        fold = 128 // C
    Mf, Cf = M // fold, C * fold
    xv = x2d.reshape(Mf, Cf)
    stv = jnp.tile(stats, (1, fold)) if fold > 1 else stats
    TM = _pick_tile(Mf)
    out = pl.pallas_call(
        _bn_apply_kernel,
        out_shape=jax.ShapeDtypeStruct((Mf, Cf), ACT_DTYPE),
        grid=(Mf // TM,),
        in_specs=[pl.BlockSpec((TM, Cf), lambda i: (i, 0)),
                  pl.BlockSpec((2, Cf), lambda i: (0, 0))],
        out_specs=pl.BlockSpec((TM, Cf), lambda i: (i, 0)),
        compiler_params=_cparams("parallel"),
    )(xv, stv)
    return out.reshape(M, C)


# -----------------------------------------------------------------------------
# MaxPool2d / MaxUnpool2d bookkeeping (scatter-free XLA glue, NHWC, bf16).
# TODO(synk): fuse bn4+pool and unpool+skip-add into Pallas kernels.
# -----------------------------------------------------------------------------
def maxpool2x2(x):
    B, H, W, C = x.shape
    h, w = H // 2, W // 2
    xw = x.reshape(B, h, 2, w, 2, C).transpose(0, 1, 3, 2, 4, 5)
    xw = xw.reshape(B, h, w, 4, C)
    pooled = jnp.max(xw, axis=3)
    kidx = jnp.argmax(xw, axis=3).astype(jnp.int32)   # 0..3 = dh*2 + dw
    return pooled, kidx


def maxunpool2x2_add(x_pooled, kidx, skip):
    B, h, w, C = x_pooled.shape
    sel = (kidx[:, :, :, None, :] ==
           jnp.arange(4).reshape(1, 1, 1, 4, 1)).astype(skip.dtype)
    vals = x_pooled[:, :, :, None, :] * sel            # [B, h, w, 4, C]
    up = vals.reshape(B, h, w, 2, 2, C).transpose(0, 1, 3, 2, 4, 5)
    up = up.reshape(B, 2 * h, 2 * w, C)
    return up + skip


# -----------------------------------------------------------------------------
# Blocks (channels-last, [B, H*W, C] slabs)
# -----------------------------------------------------------------------------
def _attention_tail(o_raw, st3, p):
    B, N, C = o_raw.shape
    qkv = qkv_project(o_raw.reshape(B * N, C), st3, p['wqkv'], p['bqkv'])
    att_raw, st4 = attention(qkv.reshape(B, N, -1), o_raw, st3, p['gamma'])
    out2d = bn_apply(att_raw.reshape(B * N, C), st4)           # bn4
    return out2d.reshape(B, N, C)


def dense_block(x, p, H, W):
    """CompetitiveDenseBlock (outblock=False everywhere in AttFastSurferCNN)."""
    B, N, _ = x.shape
    c0, st1 = conv3x3(x, p['w0'], p['b0'], H, W, mode='prelu',
                      alpha=p['alpha'])                         # conv0(prelu(x))
    c1, x1max, st2 = conv3x3(c0, p['w1'], p['b1'], H, W, mode='bn_max_prelu',
                             stats=st1, partner=x, alpha=p['alpha'],
                             emit_partner=True)   # conv1(prelu(max(bn1(c0), x)))
    o_raw, st3 = conv1x1(c1.reshape(B * N, -1), p['w2'], p['b2'], stats=st2,
                         partner=x1max.reshape(B * N, -1), alpha=p['alpha'],
                         want_stats=True)     # conv2(prelu(max(bn2(c1), x1max)))
    return _attention_tail(o_raw.reshape(B, N, -1), st3, p)


def dense_block_input(x, p, H, W):
    """CompetitiveDenseBlockInput."""
    B, N, Cin = x.shape
    st0 = input_stats(x.reshape(B * N, Cin))                    # bn0 stats
    c0, st1 = conv3x3(x, p['w0'], p['b0'], H, W, mode='bn', stats=st0)
    c1, x1bn, st2 = conv3x3(c0, p['w1'], p['b1'], H, W, mode='bn_prelu',
                            stats=st1, alpha=p['alpha'], emit_partner=True)
    o_raw, st3 = conv1x1(c1.reshape(B * N, -1), p['w2'], p['b2'], stats=st2,
                         partner=x1bn.reshape(B * N, -1), alpha=p['alpha'],
                         want_stats=True)
    return _attention_tail(o_raw.reshape(B, N, -1), st3, p)


def encoder_block(x, p, H, W, input_block=False):
    out = dense_block_input(x, p, H, W) if input_block else dense_block(x, p, H, W)
    B, _, C = out.shape
    out4 = out.reshape(B, H, W, C)
    pooled, kidx = maxpool2x2(out4)
    return pooled.reshape(B, (H // 2) * (W // 2), C), out4, kidx


def decoder_block(x, skip4, kidx, p, H, W):
    B, _, C = x.shape
    merged = maxunpool2x2_add(x.reshape(B, H // 2, W // 2, C), kidx, skip4)
    return dense_block(merged.reshape(B, H * W, C), p, H, W)


def forward(x_nchw, params):
    B, Cin, H, W = x_nchw.shape
    x = x_nchw.transpose(0, 2, 3, 1).astype(ACT_DTYPE).reshape(B, H * W, Cin)
    e1, s1, i1 = encoder_block(x, params['enc1'], H, W, input_block=True)
    e2, s2, i2 = encoder_block(e1, params['enc2'], H // 2, W // 2)
    e3, s3, i3 = encoder_block(e2, params['enc3'], H // 4, W // 4)
    e4, s4, i4 = encoder_block(e3, params['enc4'], H // 8, W // 8)
    bneck = dense_block(e4, params['bottleneck'], H // 16, W // 16)
    d4 = decoder_block(bneck, s4, i4, params['dec4'], H // 8, W // 8)
    d3 = decoder_block(d4, s3, i3, params['dec3'], H // 4, W // 4)
    d2 = decoder_block(d3, s2, i2, params['dec2'], H // 2, W // 2)
    d1 = decoder_block(d2, s1, i1, params['dec1'], H, W)
    Bc, Nc, Fc = d1.shape
    logits = conv1x1(d1.reshape(Bc * Nc, Fc), params['cls']['w'],
                     params['cls']['b'], out_dtype=jnp.float32)
    return logits.reshape(B, H, W, -1).transpose(0, 3, 1, 2)   # NHWC -> NCHW


# -----------------------------------------------------------------------------
# Deterministic parameter init (matches the PyTorch module's shapes/init)
# -----------------------------------------------------------------------------
def _conv_init(key, cout, cin, kh, kw):
    kw_, kb_ = jax.random.split(key)
    std = math.sqrt(2.0 / (cout * kh * kw))             # kaiming_normal fan_out
    w = std * jax.random.normal(kw_, (cout, cin, kh, kw), jnp.float32)
    bound = 1.0 / math.sqrt(cin * kh * kw)
    b = jax.random.uniform(kb_, (cout,), jnp.float32, -bound, bound)
    return w, b


def _to_tap_cat(w_oihw):      # [Cout, Cin, 3, 3] -> [9*Cin, Cout]
    w = jnp.transpose(w_oihw, (2, 3, 1, 0))             # HWIO
    return w.reshape(-1, w.shape[-1]).astype(MXU_DTYPE)


def _to_io(w_oihw):           # [Cout, Cin, 1, 1] -> [Cin, Cout]
    return jnp.transpose(w_oihw[:, :, 0, 0], (1, 0))


def make_block_params(key, cin, F):
    ks = jax.random.split(key, 6)
    c8 = max(F // 8, 1)
    w0, b0 = _conv_init(ks[0], F, cin, 3, 3)
    w1, b1 = _conv_init(ks[1], F, F, 3, 3)
    w2, b2 = _conv_init(ks[2], F, F, 1, 1)
    wq, bq = _conv_init(ks[3], c8, F, 1, 1)
    wk, bk = _conv_init(ks[4], c8, F, 1, 1)
    wv, bv = _conv_init(ks[5], F, F, 1, 1)
    return {
        'w0': _to_tap_cat(w0), 'b0': b0,
        'w1': _to_tap_cat(w1), 'b1': b1,
        'w2': _to_io(w2).astype(MXU_DTYPE), 'b2': b2,
        'wqkv': jnp.concatenate([_to_io(wq), _to_io(wk), _to_io(wv)],
                                axis=1).astype(MXU_DTYPE),
        'bqkv': jnp.concatenate([bq, bk, bv]),
        'gamma': jnp.zeros((1,), jnp.float32),          # nn.Parameter(zeros(1))
        'alpha': jnp.full((1,), 0.25, jnp.float32),     # nn.PReLU default
        # BatchNorm2d weight=1 / bias=0 per module init -> no affine term.
    }


def make_params(key, cin, F, ncls):
    ks = jax.random.split(key, 10)
    cw, cb = _conv_init(ks[9], ncls, F, 1, 1)
    return {
        'enc1': make_block_params(ks[0], cin, F),
        'enc2': make_block_params(ks[1], F, F),
        'enc3': make_block_params(ks[2], F, F),
        'enc4': make_block_params(ks[3], F, F),
        'bottleneck': make_block_params(ks[4], F, F),
        'dec4': make_block_params(ks[5], F, F),
        'dec3': make_block_params(ks[6], F, F),
        'dec2': make_block_params(ks[7], F, F),
        'dec1': make_block_params(ks[8], F, F),
        'cls': {'w': _to_io(cw).astype(MXU_DTYPE), 'b': cb},
    }


# -----------------------------------------------------------------------------
if __name__ == "__main__":
    key = jax.random.PRNGKey(0)
    kchk, kp, kx = jax.random.split(key, 3)

    # --- self-check: conv3x3 kernel vs XLA conv (exercises untiled AND the
    #     halo'd row-tiled path, including boundary clamping/masking).
    kc = jax.random.split(kchk, 3)
    Hc, Wc, Ci, Co = 12, 8, 8, 16
    xc = jax.random.normal(kc[0], (1, Hc, Wc, Ci), jnp.float32)
    wc = 0.1 * jax.random.normal(kc[1], (3, 3, Ci, Co), jnp.float32)
    bc = 0.1 * jax.random.normal(kc[2], (Co,), jnp.float32)
    xcb = xc.astype(MXU_DTYPE).astype(jnp.float32)
    wcb = wc.astype(MXU_DTYPE).astype(jnp.float32)
    ref = lax.conv_general_dilated(
        xcb, wcb, (1, 1), 'SAME',
        dimension_numbers=('NHWC', 'HWIO', 'NHWC')) + bc
    for rt in (None, 4):
        got, _ = conv3x3(xc.reshape(1, Hc * Wc, Ci).astype(ACT_DTYPE),
                         wc.reshape(9 * Ci, Co).astype(MXU_DTYPE),
                         bc, Hc, Wc, mode=None, row_tile=rt)
        err = float(jnp.max(jnp.abs(
            got.astype(jnp.float32).reshape(ref.shape) - ref)))
        assert err < 5e-2, f"conv3x3 self-check failed (row_tile={rt}): {err}"

    # --- full model forward at small shapes (spatial divisible by 16: 4 pools)
    B, Cin, H, W = 2, 4, 16, 16
    F, NCLS = 16, 4
    params = make_params(kp, Cin, F, NCLS)
    x = jax.random.normal(kx, (B, Cin, H, W), jnp.float32)

    logits = jax.jit(forward)(x, params)
    jax.block_until_ready(logits)
    assert logits.shape == (B, NCLS, H, W), logits.shape
    assert bool(jnp.all(jnp.isfinite(logits)))
    print("KERNEL_OK")
</pallas_src>

<mosaic_0001>
module attributes {stable_mosaic.version = 11 : i64} {
  func.func @kernel(%arg0: i32, %arg1: i32, %arg2: memref<1x96x8xbf16, #tpu.memory_space<vmem>>, %arg3: memref<72x16xbf16, #tpu.memory_space<vmem>>, %arg4: memref<1x16xf32, #tpu.memory_space<vmem>>, %arg5: memref<1x96x16xbf16, #tpu.memory_space<vmem>>, %arg6: memref<1x2x16xf32, #tpu.memory_space<vmem>>) attributes {dimension_semantics = [#tpu.dimension_semantics<parallel>, #tpu.dimension_semantics<parallel>], iteration_bounds = array<i64: 1, 1>, scalar_prefetch = 0 : i64, scratch_operands = 0 : i64, tpu.core_type = #tpu.core_type<tc>, window_params = [{transform_indices = @transform_0, window_bounds = array<i64: 1, 96, 8>}, {pipeline_mode = #tpu.pipeline_mode<synchronous>, transform_indices = @transform_1, window_bounds = array<i64: 72, 16>}, {pipeline_mode = #tpu.pipeline_mode<synchronous>, transform_indices = @transform_2, window_bounds = array<i64: 1, 16>}, {transform_indices = @transform_3, window_bounds = array<i64: 1, 96, 16>}, {transform_indices = @transform_4, window_bounds = array<i64: 1, 2, 16>}]} {
    %c0 = arith.constant 0 : index
    %c0_0 = arith.constant 0 : index
    %c0_1 = arith.constant 0 : index
    %0 = vector.load %arg2[%c0, %c0_0, %c0_1] : memref<1x96x8xbf16, #tpu.memory_space<vmem>>, vector<1x96x8xbf16>
    %1 = vector.shape_cast %0 : vector<1x96x8xbf16> to vector<96x8xbf16>
    %2 = arith.extf %1 : vector<96x8xbf16> to vector<96x8xf32>
    %cst = arith.constant 0.000000e+00 : f32
    %3 = vector.broadcast %cst : f32 to vector<9x8xf32>
    %4 = tpu.concatenate %3, %2, %3 in 0 : vector<9x8xf32>, vector<96x8xf32>, vector<9x8xf32> -> vector<114x8xf32>
    %5 = tpu.iota {dimensions = array<i32: 0>} : vector<96x1xi32>
    %c8_i32 = arith.constant 8 : i32
    %c0_i32 = arith.constant 0 : i32
    %6 = arith.cmpi eq, %c8_i32, %c0_i32 : i32
    %c1_i32 = arith.constant 1 : i32
    %7 = arith.select %6, %c1_i32, %c8_i32 : i32
    %8 = vector.broadcast %7 : i32 to vector<96x1xi32>
    %9 = arith.remsi %5, %8 : vector<96x1xi32>
    %c0_i32_2 = arith.constant 0 : i32
    %10 = vector.broadcast %c0_i32_2 : i32 to vector<96x1xi32>
    %11 = arith.cmpi ne, %9, %10 : vector<96x1xi32>
    %c0_i32_3 = arith.constant 0 : i32
    %12 = vector.broadcast %c0_i32_3 : i32 to vector<96x1xi32>
    %13 = arith.cmpi slt, %9, %12 : vector<96x1xi32>
    %c0_i32_4 = arith.constant 0 : i32
    %14 = arith.cmpi slt, %7, %c0_i32_4 : i32
    %15 = vector.broadcast %14 : i1 to vector<96x1xi1>
    %16 = vector.broadcast %15 : vector<96x1xi1> to vector<96x1xi1>
    %17 = arith.xori %13, %16 : vector<96x1xi1>
    %18 = arith.andi %17, %11 : vector<96x1xi1>
    %19 = vector.broadcast %7 : i32 to vector<96x1xi32>
    %20 = arith.addi %9, %19 : vector<96x1xi32>
    %21 = arith.select %18, %20, %9 : vector<96x1xi1>, vector<96x1xi32>
    %c0_i32_5 = arith.constant 0 : i32
    %22 = vector.broadcast %c0_i32_5 : i32 to vector<96x1xi32>
    %23 = arith.cmpi sgt, %21, %22 : vector<96x1xi32>
    %24 = arith.extui %23 : vector<96x1xi1> to vector<96x1xi32>
    %25 = arith.sitofp %24 : vector<96x1xi32> to vector<96x1xf32>
    %c7_i32 = arith.constant 7 : i32
    %26 = vector.broadcast %c7_i32 : i32 to vector<96x1xi32>
    %27 = arith.cmpi slt, %21, %26 : vector<96x1xi32>
    %28 = arith.extui %27 : vector<96x1xi1> to vector<96x1xi32>
    %29 = arith.sitofp %28 : vector<96x1xi32> to vector<96x1xf32>
    %30 = vector.extract_strided_slice %4 {offsets = [0, 0], sizes = [96, 8], strides = [1, 1]} : vector<114x8xf32> to vector<96x8xf32>
    %31 = vector.broadcast %25 : vector<96x1xf32> to vector<96x8xf32>
    %32 = arith.mulf %30, %31 : vector<96x8xf32>
    %33 = vector.extract_strided_slice %4 {offsets = [1, 0], sizes = [96, 8], strides = [1, 1]} : vector<114x8xf32> to vector<96x8xf32>
    %34 = vector.extract_strided_slice %4 {offsets = [2, 0], sizes = [96, 8], strides = [1, 1]} : vector<114x8xf32> to vector<96x8xf32>
    %35 = vector.broadcast %29 : vector<96x1xf32> to vector<96x8xf32>
    %36 = arith.mulf %34, %35 : vector<96x8xf32>
    %37 = vector.extract_strided_slice %4 {offsets = [8, 0], sizes = [96, 8], strides = [1, 1]} : vector<114x8xf32> to vector<96x8xf32>
    %38 = vector.broadcast %25 : vector<96x1xf32> to vector<96x8xf32>
    %39 = arith.mulf %37, %38 : vector<96x8xf32>
    %40 = vector.extract_strided_slice %4 {offsets = [9, 0], sizes = [96, 8], strides = [1, 1]} : vector<114x8xf32> to vector<96x8xf32>
    %41 = vector.extract_strided_slice %4 {offsets = [10, 0], sizes = [96, 8], strides = [1, 1]} : vector<114x8xf32> to vector<96x8xf32>
    %42 = vector.broadcast %29 : vector<96x1xf32> to vector<96x8xf32>
    %43 = arith.mulf %41, %42 : vector<96x8xf32>
    %44 = vector.extract_strided_slice %4 {offsets = [16, 0], sizes = [96, 8], strides = [1, 1]} : vector<114x8xf32> to vector<96x8xf32>
    %45 = vector.broadcast %25 : vector<96x1xf32> to vector<96x8xf32>
    %46 = arith.mulf %44, %45 : vector<96x8xf32>
    %47 = vector.extract_strided_slice %4 {offsets = [17, 0], sizes = [96, 8], strides = [1, 1]} : vector<114x8xf32> to vector<96x8xf32>
    %48 = vector.extract_strided_slice %4 {offsets = [18, 0], sizes = [96, 8], strides = [1, 1]} : vector<114x8xf32> to vector<96x8xf32>
    %49 = vector.broadcast %29 : vector<96x1xf32> to vector<96x8xf32>
    %50 = arith.mulf %48, %49 : vector<96x8xf32>
    %51 = tpu.concatenate %32, %33, %36, %39, %40, %43, %46, %47, %50 in 1 : vector<96x8xf32>, vector<96x8xf32>, vector<96x8xf32>, vector<96x8xf32>, vector<96x8xf32>, vector<96x8xf32>, vector<96x8xf32>, vector<96x8xf32>, vector<96x8xf32> -> vector<96x72xf32>
    %52 = arith.truncf %51 : vector<96x72xf32> to vector<96x72xbf16>
    %c0_6 = arith.constant 0 : index
    %c0_7 = arith.constant 0 : index
    %53 = vector.load %arg3[%c0_6, %c0_7] : memref<72x16xbf16, #tpu.memory_space<vmem>>, vector<72x16xbf16>
    %cst_8 = arith.constant dense<0.000000e+00> : vector<96x16xf32>
    %54 = tpu.matmul %52, %53, %cst_8 {dimension_numbers = #tpu.dot_dimension_numbers<[1], [0], [0], [1], [0, 0, 1, 1], [], []>} : vector<96x72xbf16>, vector<72x16xbf16>, vector<96x16xf32> -> vector<96x16xf32>
    %c0_9 = arith.constant 0 : index
    %c0_10 = arith.constant 0 : index
    %55 = vector.load %arg4[%c0_9, %c0_10] : memref<1x16xf32, #tpu.memory_space<vmem>>, vector<1x16xf32>
    %56 = vector.broadcast %55 : vector<1x16xf32> to vector<96x16xf32>
    %57 = arith.addf %54, %56 : vector<96x16xf32>
    %58 = arith.truncf %57 : vector<96x16xf32> to vector<96x16xbf16>
    %c0_11 = arith.constant 0 : index
    %c0_12 = arith.constant 0 : index
    %c0_13 = arith.constant 0 : index
    %59 = vector.load %arg5[%c0_11, %c0_12, %c0_13] : memref<1x96x16xbf16, #tpu.memory_space<vmem>>, vector<1x96x16xbf16>
    %60 = vector.shape_cast %59 : vector<1x96x16xbf16> to vector<96x16xbf16>
    %61 = vector.shape_cast %58 : vector<96x16xbf16> to vector<1x96x16xbf16>
    tpu.vector_store %arg5[%c0_11, %c0_12, %c0_13], %61 {strides = array<i32>} : memref<1x96x16xbf16, #tpu.memory_space<vmem>>, vector<1x96x16xbf16>,
    %62 = arith.extf %58 : vector<96x16xbf16> to vector<96x16xf32>
    %cst_14 = arith.constant dense<0.000000e+00> : vector<16xf32>
    %63 = vector.multi_reduction <add>, %62, %cst_14 [0] : vector<96x16xf32> to vector<16xf32>
    %64 = vector.shape_cast %63 : vector<16xf32> to vector<1x16xf32>
    %65 = arith.mulf %62, %62 : vector<96x16xf32>
    %cst_15 = arith.constant dense<0.000000e+00> : vector<16xf32>
    %66 = vector.multi_reduction <add>, %65, %cst_15 [0] : vector<96x16xf32> to vector<16xf32>
    %67 = vector.shape_cast %66 : vector<16xf32> to vector<1x16xf32>
    %68 = tpu.concatenate %64, %67 in 0 : vector<1x16xf32>, vector<1x16xf32> -> vector<2x16xf32>
    %c0_16 = arith.constant 0 : index
    %c0_17 = arith.constant 0 : index
    %c0_18 = arith.constant 0 : index
    %69 = vector.load %arg6[%c0_16, %c0_17, %c0_18] : memref<1x2x16xf32, #tpu.memory_space<vmem>>, vector<1x2x16xf32>
    %70 = vector.shape_cast %69 : vector<1x2x16xf32> to vector<2x16xf32>
    %71 = vector.shape_cast %68 : vector<2x16xf32> to vector<1x2x16xf32>
    tpu.vector_store %arg6[%c0_16, %c0_17, %c0_18], %71 {strides = array<i32>} : memref<1x2x16xf32, #tpu.memory_space<vmem>>, vector<1x2x16xf32>,
    return
  }
  func.func @transform_0(%arg0: i32, %arg1: i32) -> (i32, i32, i32) {
    %c0_i32 = arith.constant 0 : i32
    %c0_i32_0 = arith.constant 0 : i32
    return %arg0, %arg1, %c0_i32 : i32, i32, i32
  }
  func.func @transform_1(%arg0: i32, %arg1: i32) -> (i32, i32) {
    %c0_i32 = arith.constant 0 : i32
    %c0_i32_0 = arith.constant 0 : i32
    %c0_i32_1 = arith.constant 0 : i32
    return %c0_i32, %c0_i32_0 : i32, i32
  }
  func.func @transform_2(%arg0: i32, %arg1: i32) -> (i32, i32) {
    %c0_i32 = arith.constant 0 : i32
    %c0_i32_0 = arith.constant 0 : i32
    %c0_i32_1 = arith.constant 0 : i32
    return %c0_i32, %c0_i32_0 : i32, i32
  }
  func.func @transform_3(%arg0: i32, %arg1: i32) -> (i32, i32, i32) {
    %c0_i32 = arith.constant 0 : i32
    %c0_i32_0 = arith.constant 0 : i32
    return %arg0, %arg1, %c0_i32 : i32, i32, i32
  }
  func.func @transform_4(%arg0: i32, %arg1: i32) -> (i32, i32, i32) {
    %c1_i32 = arith.constant 1 : i32
    %0 = arith.muli %arg0, %c1_i32 : i32
    %1 = arith.addi %0, %arg1 : i32
    %c0_i32 = arith.constant 0 : i32
    %c0_i32_0 = arith.constant 0 : i32
    %c0_i32_1 = arith.constant 0 : i32
    return %1, %c0_i32, %c0_i32_0 : i32, i32, i32
  }
}

</mosaic_0001>

<llo_original>
// kernel: tpu_custom_call.1
$region0: #{tpu_custom_call.1}
  #allocation0 [shape = 'u32[]', space=smem, size = 0x4, offset = 0x4, fixed_abs, tag = 'smem constant byte address 0x4 - core index']
  #allocation1 [shape = 'u32[144,128]{1,0:T(1,128)}', space=vmem, size = 0x12000, scoped, tag = 'internal scratch']
  %s0 = inlined_call_operand.vmem [shape: bf16[1,96,8], index: 0, kind: input, shape index: {}]
  %s1 = inlined_call_operand.vmem [shape: bf16[72,16], index: 1, kind: input, shape index: {}]
  %s2 = inlined_call_operand.vmem [shape: f32[1,16], index: 2, kind: input, shape index: {}]
  %s3 = inlined_call_operand.vmem [shape: bf16[1,96,16], index: 3, kind: output, shape index: {0}]
  %s4 = inlined_call_operand.hbm [shape: f32[1,2,16], index: 4, kind: output, shape index: {1}]
  %5 = xla_tuple %s3, %s4
  %s6 = sld [smem:[#allocation0]]
  $region30: #{tpu_custom_call.1} parent=0
    _
  %s8 = ssub.s32 1, %s6
  %s9 = scalar_select 0, %s8, %s6
  $region1: #{tpu_custom_call.1} parent=0
    #allocation2 [shape = 'u8[1024]{0}', space=vmem, size = 0x400, scoped, tag = 'output window, operand 1, single buffered']
    #allocation3 [shape = 's32[1]{0}', space=sflag, size = 0x4, scoped, tag = 'scoped memory for tpu_custom_call.1']
    %10 = vsyncpa [#allocation3], 0
    // Predicated region
    $region2: #{tpu_custom_call.1} parent=1 // pred_check
      _
    $region3: #{tpu_custom_call.1} parent=1 // pred_check_branch
      %12 = sbr.rel (0) target = $region5
    $region4: #{tpu_custom_call.1} parent=1 // pred_region
      _
    $region5: #{tpu_custom_call.1} parent=1 // pred_fallthru
      _
    // Predicated region
    $region6: #{tpu_custom_call.1} parent=1 // pred_check
      _
    $region7: #{tpu_custom_call.1} parent=1 // pred_check_branch
      %14 = sbr.rel (0) target = $region9
    $region8: #{tpu_custom_call.1} parent=1 // pred_region
      _
    $region9: #{tpu_custom_call.1} parent=1 // pred_fallthru
      _
    // Predicated region
    $region10: #{tpu_custom_call.1} parent=1 // pred_check
      _
    $region11: #{tpu_custom_call.1} parent=1 // pred_check_branch
      %16 = sbr.rel (0) target = $region13
    $region12: #{tpu_custom_call.1} parent=1 // pred_region
      _
    $region13: #{tpu_custom_call.1} parent=1 // pred_fallthru
      _
    %s17 = sadd.s32 0, 0
    %v19 = vld [vmem:[%s0] sm:$0xf]
    %v20 = vld [vmem:[%s0 + $0x4] sm:$0xf]
    %v21 = vld [vmem:[%s0 + $0x8] sm:$0xf]
    %v22 = vld [vmem:[%s0 + $0xc] sm:$0xf]
    %v23 = vld [vmem:[%s0 + $0x10] sm:$0xf]
    %v24 = vld [vmem:[%s0 + $0x14] sm:$0xf]
    %v25 = vld [vmem:[%s0 + $0x18] sm:$0xf]
    %v26 = vld [vmem:[%s0 + $0x1c] sm:$0xf]
    %v27 = vld [vmem:[%s0 + $0x20] sm:$0xf]
    %v28 = vld [vmem:[%s0 + $0x24] sm:$0xf]
    %v29 = vld [vmem:[%s0 + $0x28] sm:$0xf]
    %v30 = vld [vmem:[%s0 + $0x2c] sm:$0xf]
    %v31 = vunpack.c.l.bf16 %v19
    %v32 = vunpack.c.l.bf16 %v20
    %v33 = vunpack.c.l.bf16 %v21
    %v34 = vunpack.c.l.bf16 %v22
    %v35 = vunpack.c.l.bf16 %v23
    %v36 = vunpack.c.l.bf16 %v24
    %v37 = vunpack.c.l.bf16 %v25
    %v38 = vunpack.c.l.bf16 %v26
    %v39 = vunpack.c.l.bf16 %v27
    %v40 = vunpack.c.l.bf16 %v28
    %v41 = vunpack.c.l.bf16 %v29
    %v42 = vunpack.c.l.bf16 %v30
    %vm55 = vcmask 1040384
    %v56 = vrot.slane %v31, 7
    %v57 = vrot.slane %v32, 7
    %v58 = vsel %vm55, %v56, %v57
    %v59 = vrot.slane %v33, 7
    %v60 = vsel %vm55, %v57, %v59
    %v61 = vrot.slane %v34, 7
    %v62 = vsel %vm55, %v59, %v61
    %v63 = vrot.slane %v35, 7
    %v64 = vsel %vm55, %v61, %v63
    %v65 = vrot.slane %v36, 7
    %v66 = vsel %vm55, %v63, %v65
    %v67 = vrot.slane %v37, 7
    %v68 = vsel %vm55, %v65, %v67
    %v69 = vrot.slane %v38, 7
    %v70 = vsel %vm55, %v67, %v69
    %v71 = vrot.slane %v39, 7
    %v72 = vsel %vm55, %v69, %v71
    %v73 = vrot.slane %v40, 7
    %v74 = vsel %vm55, %v71, %v73
    %v75 = vrot.slane %v41, 7
    %v76 = vsel %vm55, %v73, %v75
    %v77 = vrot.slane %v42, 7
    %v78 = vsel %vm55, %v75, %v77
    %v92 = vsel %vm55, 0.0, %v56
    %v93 = vsel %vm55, %v77, 0.0
    %v94 = vlaneseq
    %v95 = vshrl.u32 %v94, 7
    %v96 = vadd.s32 %v95, 8
    %v97 = vadd.s32 %v95, 16
    %v98 = vadd.s32 %v95, 24
    %v99 = vadd.s32 %v95, 32
    %v100 = vadd.s32 %v95, 40
    %v101 = vadd.s32 %v95, 48
    %v102 = vadd.s32 %v95, 56
    %v103 = vadd.s32 %v95, 64
    %v104 = vadd.s32 %v95, 72
    %v105 = vadd.s32 %v95, 80
    %v106 = vadd.s32 %v95, 88
    %vm107 = vcmp.lt.s32.totalorder %v95, 0
    %v108 = vsub.s32 0, %v95
    %v109 = vsel %vm107, %v108, %v95
    %v110 = vshrl.u32 %v109, 3
    %v111 = vand.u32 %v109, 7
    %v112 = vsub.s32 0, %v111
    %v113 = vsel %vm107, %v112, %v111
    %vm114 = vcmp.lt.s32.totalorder %v96, 0
    %v115 = vsub.s32 0, %v96
    %v116 = vsel %vm114, %v115, %v96
    %v117 = vshrl.u32 %v116, 3
    %v118 = vand.u32 %v116, 7
    %v119 = vsub.s32 0, %v118
    %v120 = vsel %vm114, %v119, %v118
    %vm121 = vcmp.lt.s32.totalorder %v97, 0
    %v122 = vsub.s32 0, %v97
    %v123 = vsel %vm121, %v122, %v97
    %v124 = vshrl.u32 %v123, 3
    %v125 = vand.u32 %v123, 7
    %v126 = vsub.s32 0, %v125
    %v127 = vsel %vm121, %v126, %v125
    %vm128 = vcmp.lt.s32.totalorder %v98, 0
    %v129 = vsub.s32 0, %v98
    %v130 = vsel %vm128, %v129, %v98
    %v131 = vshrl.u32 %v130, 3
    %v132 = vand.u32 %v130, 7
    %v133 = vsub.s32 0, %v132
    %v134 = vsel %vm128, %v133, %v132
    %vm135 = vcmp.lt.s32.totalorder %v99, 0
    %v136 = vsub.s32 0, %v99
    %v137 = vsel %vm135, %v136, %v99
    %v138 = vshrl.u32 %v137, 3
    %v139 = vand.u32 %v137, 7
    %v140 = vsub.s32 0, %v139
    %v141 = vsel %vm135, %v140, %v139
    %vm142 = vcmp.lt.s32.totalorder %v100, 0
    %v143 = vsub.s32 0, %v100
    %v144 = vsel %vm142, %v143, %v100
    %v145 = vshrl.u32 %v144, 3
    %v146 = vand.u32 %v144, 7
    %v147 = vsub.s32 0, %v146
    %v148 = vsel %vm142, %v147, %v146
    %vm149 = vcmp.lt.s32.totalorder %v101, 0
    %v150 = vsub.s32 0, %v101
    %v151 = vsel %vm149, %v150, %v101
    %v152 = vshrl.u32 %v151, 3
    %v153 = vand.u32 %v151, 7
    %v154 = vsub.s32 0, %v153
    %v155 = vsel %vm149, %v154, %v153
    %vm156 = vcmp.lt.s32.totalorder %v102, 0
    %v157 = vsub.s32 0, %v102
    %v158 = vsel %vm156, %v157, %v102
    %v159 = vshrl.u32 %v158, 3
    %v160 = vand.u32 %v158, 7
    %v161 = vsub.s32 0, %v160
    %v162 = vsel %vm156, %v161, %v160
    %vm163 = vcmp.lt.s32.totalorder %v103, 0
    %v164 = vsub.s32 0, %v103
    %v165 = vsel %vm163, %v164, %v103
    %v166 = vshrl.u32 %v165, 3
    %v167 = vand.u32 %v165, 7
    %v168 = vsub.s32 0, %v167
    %v169 = vsel %vm163, %v168, %v167
    %vm170 = vcmp.lt.s32.totalorder %v104, 0
    %v171 = vsub.s32 0, %v104
    %v172 = vsel %vm170, %v171, %v104
    %v173 = vshrl.u32 %v172, 3
    %v174 = vand.u32 %v172, 7
    %v175 = vsub.s32 0, %v174
    %v176 = vsel %vm170, %v175, %v174
    %vm177 = vcmp.lt.s32.totalorder %v105, 0
    %v178 = vsub.s32 0, %v105
    %v179 = vsel %vm177, %v178, %v105
    %v180 = vshrl.u32 %v179, 3
    %v181 = vand.u32 %v179, 7
    %v182 = vsub.s32 0, %v181
    %v183 = vsel %vm177, %v182, %v181
    %vm184 = vcmp.lt.s32.totalorder %v106, 0
    %v185 = vsub.s32 0, %v106
    %v186 = vsel %vm184, %v185, %v106
    %v187 = vshrl.u32 %v186, 3
    %v188 = vand.u32 %v186, 7
    %v189 = vsub.s32 0, %v188
    %v190 = vsel %vm184, %v189, %v188
    %vm191 = vcmp.ne.s32.totalorder %v113, 0
    %vm192 = vcmp.ne.s32.totalorder %v120, 0
    %vm193 = vcmp.ne.s32.totalorder %v127, 0
    %vm194 = vcmp.ne.s32.totalorder %v134, 0
    %vm195 = vcmp.ne.s32.totalorder %v141, 0
    %vm196 = vcmp.ne.s32.totalorder %v148, 0
    %vm197 = vcmp.ne.s32.totalorder %v155, 0
    %vm198 = vcmp.ne.s32.totalorder %v162, 0
    %vm199 = vcmp.ne.s32.totalorder %v169, 0
    %vm200 = vcmp.ne.s32.totalorder %v176, 0
    %vm201 = vcmp.ne.s32.totalorder %v183, 0
    %vm202 = vcmp.ne.s32.totalorder %v190, 0
    %vm203 = vcmp.lt.s32.totalorder %v113, 0
    %vm204 = vcmp.lt.s32.totalorder %v120, 0
    %vm205 = vcmp.lt.s32.totalorder %v127, 0
    %vm206 = vcmp.lt.s32.totalorder %v134, 0
    %vm207 = vcmp.lt.s32.totalorder %v141, 0
    %vm208 = vcmp.lt.s32.totalorder %v148, 0
    %vm209 = vcmp.lt.s32.totalorder %v155, 0
    %vm210 = vcmp.lt.s32.totalorder %v162, 0
    %vm211 = vcmp.lt.s32.totalorder %v169, 0
    %vm212 = vcmp.lt.s32.totalorder %v176, 0
    %vm213 = vcmp.lt.s32.totalorder %v183, 0
    %vm214 = vcmp.lt.s32.totalorder %v190, 0
    %vm215 = vmand %vm203, %vm191
    %vm216 = vmand %vm204, %vm192
    %vm217 = vmand %vm205, %vm193
    %vm218 = vmand %vm206, %vm194
    %vm219 = vmand %vm207, %vm195
    %vm220 = vmand %vm208, %vm196
    %vm221 = vmand %vm209, %vm197
    %vm222 = vmand %vm210, %vm198
    %vm223 = vmand %vm211, %vm199
    %vm224 = vmand %vm212, %vm200
    %vm225 = vmand %vm213, %vm201
    %vm226 = vmand %vm214, %vm202
    %v227 = vadd.s32 %v113, 8
    %v228 = vadd.s32 %v120, 8
    %v229 = vadd.s32 %v127, 8
    %v230 = vadd.s32 %v134, 8
    %v231 = vadd.s32 %v141, 8
    %v232 = vadd.s32 %v148, 8
    %v233 = vadd.s32 %v155, 8
    %v234 = vadd.s32 %v162, 8
    %v235 = vadd.s32 %v169, 8
    %v236 = vadd.s32 %v176, 8
    %v237 = vadd.s32 %v183, 8
    %v238 = vadd.s32 %v190, 8
    %v239 = vsel %vm215, %v227, %v113
    %v240 = vsel %vm216, %v228, %v120
    %v241 = vsel %vm217, %v229, %v127
    %v242 = vsel %vm218, %v230, %v134
    %v243 = vsel %vm219, %v231, %v141
    %v244 = vsel %vm220, %v232, %v148
    %v245 = vsel %vm221, %v233, %v155
    %v246 = vsel %vm222, %v234, %v162
    %v247 = vsel %vm223, %v235, %v169
    %v248 = vsel %vm224, %v236, %v176
    %v249 = vsel %vm225, %v237, %v183
    %v250 = vsel %vm226, %v238, %v190
    %vm251 = vcmp.gt.s32.totalorder %v239, 0
    %vm252 = vcmp.gt.s32.totalorder %v240, 0
    %vm253 = vcmp.gt.s32.totalorder %v241, 0
    %vm254 = vcmp.gt.s32.totalorder %v242, 0
    %vm255 = vcmp.gt.s32.totalorder %v243, 0
    %vm256 = vcmp.gt.s32.totalorder %v244, 0
    %vm257 = vcmp.gt.s32.totalorder %v245, 0
    %vm258 = vcmp.gt.s32.totalorder %v246, 0
    %vm259 = vcmp.gt.s32.totalorder %v247, 0
    %vm260 = vcmp.gt.s32.totalorder %v248, 0
    %vm261 = vcmp.gt.s32.totalorder %v249, 0
    %vm262 = vcmp.gt.s32.totalorder %v250, 0
    %v263 = vsel %vm251, 1, 0
    %v264 = vsel %vm252, 1, 0
    %v265 = vsel %vm253, 1, 0
    %v266 = vsel %vm254, 1, 0
    %v267 = vsel %vm255, 1, 0
    %v268 = vsel %vm256, 1, 0
    %v269 = vsel %vm257, 1, 0
    %v270 = vsel %vm258, 1, 0
    %v271 = vsel %vm259, 1, 0
    %v272 = vsel %vm260, 1, 0
    %v273 = vsel %vm261, 1, 0
    %v274 = vsel %vm262, 1, 0
    %v275 = vcvt.s32.f32 %v263
    %v276 = vcvt.s32.f32 %v264
    %v277 = vcvt.s32.f32 %v265
    %v278 = vcvt.s32.f32 %v266
    %v279 = vcvt.s32.f32 %v267
    %v280 = vcvt.s32.f32 %v268
    %v281 = vcvt.s32.f32 %v269
    %v282 = vcvt.s32.f32 %v270
    %v283 = vcvt.s32.f32 %v271
    %v284 = vcvt.s32.f32 %v272
    %v285 = vcvt.s32.f32 %v273
    %v286 = vcvt.s32.f32 %v274
    %vm287 = vcmp.lt.s32.totalorder %v239, 7
    %vm288 = vcmp.lt.s32.totalorder %v240, 7
    %vm289 = vcmp.lt.s32.totalorder %v241, 7
    %vm290 = vcmp.lt.s32.totalorder %v242, 7
    %vm291 = vcmp.lt.s32.totalorder %v243, 7
    %vm292 = vcmp.lt.s32.totalorder %v244, 7
    %vm293 = vcmp.lt.s32.totalorder %v245, 7
    %vm294 = vcmp.lt.s32.totalorder %v246, 7
    %vm295 = vcmp.lt.s32.totalorder %v247, 7
    %vm296 = vcmp.lt.s32.totalorder %v248, 7
    %vm297 = vcmp.lt.s32.totalorder %v249, 7
    %vm298 = vcmp.lt.s32.totalorder %v250, 7
    %v299 = vsel %vm287, 1, 0
    %v300 = vsel %vm288, 1, 0
    %v301 = vsel %vm289, 1, 0
    %v302 = vsel %vm290, 1, 0
    %v303 = vsel %vm291, 1, 0
    %v304 = vsel %vm292, 1, 0
    %v305 = vsel %vm293, 1, 0
    %v306 = vsel %vm294, 1, 0
    %v307 = vsel %vm295, 1, 0
    %v308 = vsel %vm296, 1, 0
    %v309 = vsel %vm297, 1, 0
    %v310 = vsel %vm298, 1, 0
    %v311 = vcvt.s32.f32 %v299
    %v312 = vcvt.s32.f32 %v300
    %v313 = vcvt.s32.f32 %v301
    %v314 = vcvt.s32.f32 %v302
    %v315 = vcvt.s32.f32 %v303
    %v316 = vcvt.s32.f32 %v304
    %v317 = vcvt.s32.f32 %v305
    %v318 = vcvt.s32.f32 %v306
    %v319 = vcvt.s32.f32 %v307
    %v320 = vcvt.s32.f32 %v308
    %v321 = vcvt.s32.f32 %v309
    %v322 = vcvt.s32.f32 %v310
    %v323 = vmul.f32 %v275, 0.0
    %v324 = vmul.f32 %v92, %v276
    %v325 = vmul.f32 %v58, %v277
    %v326 = vmul.f32 %v60, %v278
    %v327 = vmul.f32 %v62, %v279
    %v328 = vmul.f32 %v64, %v280
    %v329 = vmul.f32 %v66, %v281
    %v330 = vmul.f32 %v68, %v282
    %v331 = vmul.f32 %v70, %v283
    %v332 = vmul.f32 %v72, %v284
    %v333 = vmul.f32 %v74, %v285
    %v334 = vmul.f32 %v76, %v286
    %vm347 = vcmask 1041408
    %v348 = vrot.slane %v311, 6
    %v349 = vrot.slane %v312, 6
    %v350 = vsel %vm347, %v348, %v349
    %v351 = vrot.slane %v313, 6
    %v352 = vsel %vm347, %v349, %v351
    %v353 = vrot.slane %v314, 6
    %v354 = vsel %vm347, %v351, %v353
    %v355 = vrot.slane %v315, 6
    %v356 = vsel %vm347, %v353, %v355
    %v357 = vrot.slane %v316, 6
    %v358 = vsel %vm347, %v355, %v357
    %v359 = vrot.slane %v317, 6
    %v360 = vsel %vm347, %v357, %v359
    %v361 = vrot.slane %v318, 6
    %v362 = vsel %vm347, %v359, %v361
    %v363 = vrot.slane %v319, 6
    %v364 = vsel %vm347, %v361, %v363
    %v365 = vrot.slane %v320, 6
    %v366 = vsel %vm347, %v363, %v365
    %v367 = vrot.slane %v321, 6
    %v368 = vsel %vm347, %v365, %v367
    %v369 = vrot.slane %v322, 6
    %v370 = vsel %vm347, %v367, %v369
    %v384 = vmul.f32 %v348, 0.0
    %v385 = vmul.f32 %v92, %v350
    %v386 = vmul.f32 %v58, %v352
    %v387 = vmul.f32 %v60, %v354
    %v388 = vmul.f32 %v62, %v356
    %v389 = vmul.f32 %v64, %v358
    %v390 = vmul.f32 %v66, %v360
    %v391 = vmul.f32 %v68, %v362
    %v392 = vmul.f32 %v70, %v364
    %v393 = vmul.f32 %v72, %v366
    %v394 = vmul.f32 %v74, %v368
    %v395 = vmul.f32 %v76, %v370
    %v396 = vmul.f32 %v78, %v369
    %v397 = vmul.f32 %v92, %v275
    %v398 = vmul.f32 %v58, %v276
    %v399 = vmul.f32 %v60, %v277
    %v400 = vmul.f32 %v62, %v278
    %v401 = vmul.f32 %v64, %v279
    %v402 = vmul.f32 %v66, %v280
    %v403 = vmul.f32 %v68, %v281
    %v404 = vmul.f32 %v70, %v282
    %v405 = vmul.f32 %v72, %v283
    %v406 = vmul.f32 %v74, %v284
    %v407 = vmul.f32 %v76, %v285
    %v408 = vmul.f32 %v78, %v286
    %v409 = vmul.f32 %v92, %v348
    %v410 = vmul.f32 %v58, %v350
    %v411 = vmul.f32 %v60, %v352
    %v412 = vmul.f32 %v62, %v354
    %v413 = vmul.f32 %v64, %v356
    %v414 = vmul.f32 %v66, %v358
    %v415 = vmul.f32 %v68, %v360
    %v416 = vmul.f32 %v70, %v362
    %v417 = vmul.f32 %v72, %v364
    %v418 = vmul.f32 %v74, %v366
    %v419 = vmul.f32 %v76, %v368
    %v420 = vmul.f32 %v78, %v370
    %v421 = vmul.f32 %v93, %v369
    %v422 = vmul.f32 %v58, %v275
    %v423 = vmul.f32 %v60, %v276
    %v424 = vmul.f32 %v62, %v277
    %v425 = vmul.f32 %v64, %v278
    %v426 = vmul.f32 %v66, %v279
    %v427 = vmul.f32 %v68, %v280
    %v428 = vmul.f32 %v70, %v281
    %v429 = vmul.f32 %v72, %v282
    %v430 = vmul.f32 %v74, %v283
    %v431 = vmul.f32 %v76, %v284
    %v432 = vmul.f32 %v78, %v285
    %v433 = vmul.f32 %v93, %v286
    %v434 = vmul.f32 %v58, %v348
    %v435 = vmul.f32 %v60, %v350
    %v436 = vmul.f32 %v62, %v352
    %v437 = vmul.f32 %v64, %v354
    %v438 = vmul.f32 %v66, %v356
    %v439 = vmul.f32 %v68, %v358
    %v440 = vmul.f32 %v70, %v360
    %v441 = vmul.f32 %v72, %v362
    %v442 = vmul.f32 %v74, %v364
    %v443 = vmul.f32 %v76, %v366
    %v444 = vmul.f32 %v78, %v368
    %v445 = vmul.f32 %v93, %v370
    %v446 = vmul.f32 %v369, 0.0
    %vm449 = vcmask 1046528
    %v450 = vrot.slane 0.0, 1
    %v451 = vrot.slane %v92, 1
    %v452 = vsel %vm449, %v450, %v451
    %v453 = vrot.slane %v58, 1
    %v454 = vsel %vm449, %v451, %v453
    %v455 = vrot.slane %v60, 1
    %v456 = vsel %vm449, %v453, %v455
    %v457 = vrot.slane %v62, 1
    %v458 = vsel %vm449, %v455, %v457
    %v459 = vrot.slane %v64, 1
    %v460 = vsel %vm449, %v457, %v459
    %v461 = vrot.slane %v66, 1
    %v462 = vsel %vm449, %v459, %v461
    %v463 = vrot.slane %v68, 1
    %v464 = vsel %vm449, %v461, %v463
    %v465 = vrot.slane %v70, 1
    %v466 = vsel %vm449, %v463, %v465
    %v467 = vrot.slane %v72, 1
    %v468 = vsel %vm449, %v465, %v467
    %v469 = vrot.slane %v74, 1
    %v470 = vsel %vm449, %v467, %v469
    %v471 = vrot.slane %v76, 1
    %v472 = vsel %vm449, %v469, %v471
    %v473 = vrot.slane %v78, 1
    %v474 = vsel %vm449, %v471, %v473
    %475 = vrot.lane.b32.xlu0 %v452, 8
    %v476 = vpop.permute.xlu0 %475
    %477 = vrot.lane.b32.xlu0 %v454, 8
    %v478 = vpop.permute.xlu0 %477
    %479 = vrot.lane.b32.xlu0 %v456, 8
    %v480 = vpop.permute.xlu0 %479
    %481 = vrot.lane.b32.xlu0 %v458, 8
    %v482 = vpop.permute.xlu0 %481
    %483 = vrot.lane.b32.xlu0 %v460, 8
    %v484 = vpop.permute.xlu0 %483
    %485 = vrot.lane.b32.xlu0 %v462, 8
    %v486 = vpop.permute.xlu0 %485
    %487 = vrot.lane.b32.xlu0 %v464, 8
    %v488 = vpop.permute.xlu0 %487
    %489 = vrot.lane.b32.xlu0 %v466, 8
    %v490 = vpop.permute.xlu0 %489
    %491 = vrot.lane.b32.xlu0 %v468, 8
    %v492 = vpop.permute.xlu0 %491
    %493 = vrot.lane.b32.xlu0 %v470, 8
    %v494 = vpop.permute.xlu0 %493
    %495 = vrot.lane.b32.xlu0 %v472, 8
    %v496 = vpop.permute.xlu0 %495
    %497 = vrot.lane.b32.xlu0 %v474, 8
    %v498 = vpop.permute.xlu0 %497
    %vm524 = vcmask 1045504
    %v525 = vrot.slane %v384, 2
    %v526 = vrot.slane %v385, 2
    %v527 = vsel %vm524, %v525, %v526
    %v528 = vrot.slane %v386, 2
    %v529 = vsel %vm524, %v526, %v528
    %v530 = vrot.slane %v387, 2
    %v531 = vsel %vm524, %v528, %v530
    %v532 = vrot.slane %v388, 2
    %v533 = vsel %vm524, %v530, %v532
    %v534 = vrot.slane %v389, 2
    %v535 = vsel %vm524, %v532, %v534
    %v536 = vrot.slane %v390, 2
    %v537 = vsel %vm524, %v534, %v536
    %v538 = vrot.slane %v391, 2
    %v539 = vsel %vm524, %v536, %v538
    %v540 = vrot.slane %v392, 2
    %v541 = vsel %vm524, %v538, %v540
    %v542 = vrot.slane %v393, 2
    %v543 = vsel %vm524, %v540, %v542
    %v544 = vrot.slane %v394, 2
    %v545 = vsel %vm524, %v542, %v544
    %v546 = vrot.slane %v395, 2
    %v547 = vsel %vm524, %v544, %v546
    %v548 = vrot.slane %v396, 2
    %v549 = vsel %vm524, %v546, %v548
    %550 = vrot.lane.b32.xlu0 %v527, 16
    %v551 = vpop.permute.xlu0 %550
    %552 = vrot.lane.b32.xlu0 %v529, 16
    %v553 = vpop.permute.xlu0 %552
    %554 = vrot.lane.b32.xlu0 %v531, 16
    %v555 = vpop.permute.xlu0 %554
    %556 = vrot.lane.b32.xlu0 %v533, 16
    %v557 = vpop.permute.xlu0 %556
    %558 = vrot.lane.b32.xlu0 %v535, 16
    %v559 = vpop.permute.xlu0 %558
    %560 = vrot.lane.b32.xlu0 %v537, 16
    %v561 = vpop.permute.xlu0 %560
    %562 = vrot.lane.b32.xlu0 %v539, 16
    %v563 = vpop.permute.xlu0 %562
    %564 = vrot.lane.b32.xlu0 %v541, 16
    %v565 = vpop.permute.xlu0 %564
    %566 = vrot.lane.b32.xlu0 %v543, 16
    %v567 = vpop.permute.xlu0 %566
    %568 = vrot.lane.b32.xlu0 %v545, 16
    %v569 = vpop.permute.xlu0 %568
    %570 = vrot.lane.b32.xlu0 %v547, 16
    %v571 = vpop.permute.xlu0 %570
    %572 = vrot.lane.b32.xlu0 %v549, 16
    %v573 = vpop.permute.xlu0 %572
    %598 = vrot.lane.b32.xlu0 %v397, 24
    %v599 = vpop.permute.xlu0 %598
    %600 = vrot.lane.b32.xlu0 %v398, 24
    %v601 = vpop.permute.xlu0 %600
    %602 = vrot.lane.b32.xlu0 %v399, 24
    %v603 = vpop.permute.xlu0 %602
    %604 = vrot.lane.b32.xlu0 %v400, 24
    %v605 = vpop.permute.xlu0 %604
    %606 = vrot.lane.b32.xlu0 %v401, 24
    %v607 = vpop.permute.xlu0 %606
    %608 = vrot.lane.b32.xlu0 %v402, 24
    %v609 = vpop.permute.xlu0 %608
    %610 = vrot.lane.b32.xlu0 %v403, 24
    %v611 = vpop.permute.xlu0 %610
    %612 = vrot.lane.b32.xlu0 %v404, 24
    %v613 = vpop.permute.xlu0 %612
    %614 = vrot.lane.b32.xlu0 %v405, 24
    %v615 = vpop.permute.xlu0 %614
    %616 = vrot.lane.b32.xlu0 %v406, 24
    %v617 = vpop.permute.xlu0 %616
    %618 = vrot.lane.b32.xlu0 %v407, 24
    %v619 = vpop.permute.xlu0 %618
    %620 = vrot.lane.b32.xlu0 %v408, 24
    %v621 = vpop.permute.xlu0 %620
    %v635 = vrot.slane %v93, 1
    %v636 = vsel %vm449, %v473, %v635
    %637 = vrot.lane.b32.xlu0 %v454, 32
    %v638 = vpop.permute.xlu0 %637
    %639 = vrot.lane.b32.xlu0 %v456, 32
    %v640 = vpop.permute.xlu0 %639
    %641 = vrot.lane.b32.xlu0 %v458, 32
    %v642 = vpop.permute.xlu0 %641
    %643 = vrot.lane.b32.xlu0 %v460, 32
    %v644 = vpop.permute.xlu0 %643
    %645 = vrot.lane.b32.xlu0 %v462, 32
    %v646 = vpop.permute.xlu0 %645
    %647 = vrot.lane.b32.xlu0 %v464, 32
    %v648 = vpop.permute.xlu0 %647
    %649 = vrot.lane.b32.xlu0 %v466, 32
    %v650 = vpop.permute.xlu0 %649
    %651 = vrot.lane.b32.xlu0 %v468, 32
    %v652 = vpop.permute.xlu0 %651
    %653 = vrot.lane.b32.xlu0 %v470, 32
    %v654 = vpop.permute.xlu0 %653
    %655 = vrot.lane.b32.xlu0 %v472, 32
    %v656 = vpop.permute.xlu0 %655
    %657 = vrot.lane.b32.xlu0 %v474, 32
    %v658 = vpop.permute.xlu0 %657
    %659 = vrot.lane.b32.xlu0 %v636, 32
    %v660 = vpop.permute.xlu0 %659
    %v686 = vrot.slane %v409, 2
    %v687 = vrot.slane %v410, 2
    %v688 = vsel %vm524, %v686, %v687
    %v689 = vrot.slane %v411, 2
    %v690 = vsel %vm524, %v687, %v689
    %v691 = vrot.slane %v412, 2
    %v692 = vsel %vm524, %v689, %v691
    %v693 = vrot.slane %v413, 2
    %v694 = vsel %vm524, %v691, %v693
    %v695 = vrot.slane %v414, 2
    %v696 = vsel %vm524, %v693, %v695
    %v697 = vrot.slane %v415, 2
    %v698 = vsel %vm524, %v695, %v697
    %v699 = vrot.slane %v416, 2
    %v700 = vsel %vm524, %v697, %v699
    %v701 = vrot.slane %v417, 2
    %v702 = vsel %vm524, %v699, %v701
    %v703 = vrot.slane %v418, 2
    %v704 = vsel %vm524, %v701, %v703
    %v705 = vrot.slane %v419, 2
    %v706 = vsel %vm524, %v703, %v705
    %v707 = vrot.slane %v420, 2
    %v708 = vsel %vm524, %v705, %v707
    %v709 = vrot.slane %v421, 2
    %v710 = vsel %vm524, %v707, %v709
    %711 = vrot.lane.b32.xlu0 %v688, 40
    %v712 = vpop.permute.xlu0 %711
    %713 = vrot.lane.b32.xlu0 %v690, 40
    %v714 = vpop.permute.xlu0 %713
    %715 = vrot.lane.b32.xlu0 %v692, 40
    %v716 = vpop.permute.xlu0 %715
    %717 = vrot.lane.b32.xlu0 %v694, 40
    %v718 = vpop.permute.xlu0 %717
    %719 = vrot.lane.b32.xlu0 %v696, 40
    %v720 = vpop.permute.xlu0 %719
    %721 = vrot.lane.b32.xlu0 %v698, 40
    %v722 = vpop.permute.xlu0 %721
    %723 = vrot.lane.b32.xlu0 %v700, 40
    %v724 = vpop.permute.xlu0 %723
    %725 = vrot.lane.b32.xlu0 %v702, 40
    %v726 = vpop.permute.xlu0 %725
    %727 = vrot.lane.b32.xlu0 %v704, 40
    %v728 = vpop.permute.xlu0 %727
    %729 = vrot.lane.b32.xlu0 %v706, 40
    %v730 = vpop.permute.xlu0 %729
    %731 = vrot.lane.b32.xlu0 %v708, 40
    %v732 = vpop.permute.xlu0 %731
    %733 = vrot.lane.b32.xlu0 %v710, 40
    %v734 = vpop.permute.xlu0 %733
    %759 = vrot.lane.b32.xlu0 %v422, 48
    %v760 = vpop.permute.xlu0 %759
    %761 = vrot.lane.b32.xlu0 %v423, 48
    %v762 = vpop.permute.xlu0 %761
    %763 = vrot.lane.b32.xlu0 %v424, 48
    %v764 = vpop.permute.xlu0 %763
    %765 = vrot.lane.b32.xlu0 %v425, 48
    %v766 = vpop.permute.xlu0 %765
    %767 = vrot.lane.b32.xlu0 %v426, 48
    %v768 = vpop.permute.xlu0 %767
    %769 = vrot.lane.b32.xlu0 %v427, 48
    %v770 = vpop.permute.xlu0 %769
    %771 = vrot.lane.b32.xlu0 %v428, 48
    %v772 = vpop.permute.xlu0 %771
    %773 = vrot.lane.b32.xlu0 %v429, 48
    %v774 = vpop.permute.xlu0 %773
    %775 = vrot.lane.b32.xlu0 %v430, 48
    %v776 = vpop.permute.xlu0 %775
    %777 = vrot.lane.b32.xlu0 %v431, 48
    %v778 = vpop.permute.xlu0 %777
    %779 = vrot.lane.b32.xlu0 %v432, 48
    %v780 = vpop.permute.xlu0 %779
    %781 = vrot.lane.b32.xlu0 %v433, 48
    %v782 = vpop.permute.xlu0 %781
    %v795 = vsel %vm449, %v635, %v450
    %796 = vrot.lane.b32.xlu0 %v456, 56
    %v797 = vpop.permute.xlu0 %796
    %798 = vrot.lane.b32.xlu0 %v458, 56
    %v799 = vpop.permute.xlu0 %798
    %800 = vrot.lane.b32.xlu0 %v460, 56
    %v801 = vpop.permute.xlu0 %800
    %802 = vrot.lane.b32.xlu0 %v462, 56
    %v803 = vpop.permute.xlu0 %802
    %804 = vrot.lane.b32.xlu0 %v464, 56
    %v805 = vpop.permute.xlu0 %804
    %806 = vrot.lane.b32.xlu0 %v466, 56
    %v807 = vpop.permute.xlu0 %806
    %808 = vrot.lane.b32.xlu0 %v468, 56
    %v809 = vpop.permute.xlu0 %808
    %810 = vrot.lane.b32.xlu0 %v470, 56
    %v811 = vpop.permute.xlu0 %810
    %812 = vrot.lane.b32.xlu0 %v472, 56
    %v813 = vpop.permute.xlu0 %812
    %814 = vrot.lane.b32.xlu0 %v474, 56
    %v815 = vpop.permute.xlu0 %814
    %816 = vrot.lane.b32.xlu0 %v636, 56
    %v817 = vpop.permute.xlu0 %816
    %818 = vrot.lane.b32.xlu0 %v795, 56
    %v819 = vpop.permute.xlu0 %818
    %v845 = vrot.slane %v434, 2
    %v846 = vrot.slane %v435, 2
    %v847 = vsel %vm524, %v845, %v846
    %v848 = vrot.slane %v436, 2
    %v849 = vsel %vm524, %v846, %v848
    %v850 = vrot.slane %v437, 2
    %v851 = vsel %vm524, %v848, %v850
    %v852 = vrot.slane %v438, 2
    %v853 = vsel %vm524, %v850, %v852
    %v854 = vrot.slane %v439, 2
    %v855 = vsel %vm524, %v852, %v854
    %v856 = vrot.slane %v440, 2
    %v857 = vsel %vm524, %v854, %v856
    %v858 = vrot.slane %v441, 2
    %v859 = vsel %vm524, %v856, %v858
    %v860 = vrot.slane %v442, 2
    %v861 = vsel %vm524, %v858, %v860
    %v862 = vrot.slane %v443, 2
    %v863 = vsel %vm524, %v860, %v862
    %v864 = vrot.slane %v444, 2
    %v865 = vsel %vm524, %v862, %v864
    %v866 = vrot.slane %v445, 2
    %v867 = vsel %vm524, %v864, %v866
    %v868 = vrot.slane %v446, 2
    %v869 = vsel %vm524, %v866, %v868
    %870 = vrot.lane.b32.xlu0 %v847, 64
    %v871 = vpop.permute.xlu0 %870
    %872 = vrot.lane.b32.xlu0 %v849, 64
    %v873 = vpop.permute.xlu0 %872
    %874 = vrot.lane.b32.xlu0 %v851, 64
    %v875 = vpop.permute.xlu0 %874
    %876 = vrot.lane.b32.xlu0 %v853, 64
    %v877 = vpop.permute.xlu0 %876
    %878 = vrot.lane.b32.xlu0 %v855, 64
    %v879 = vpop.permute.xlu0 %878
    %880 = vrot.lane.b32.xlu0 %v857, 64
    %v881 = vpop.permute.xlu0 %880
    %882 = vrot.lane.b32.xlu0 %v859, 64
    %v883 = vpop.permute.xlu0 %882
    %884 = vrot.lane.b32.xlu0 %v861, 64
    %v885 = vpop.permute.xlu0 %884
    %886 = vrot.lane.b32.xlu0 %v863, 64
    %v887 = vpop.permute.xlu0 %886
    %888 = vrot.lane.b32.xlu0 %v865, 64
    %v889 = vpop.permute.xlu0 %888
    %890 = vrot.lane.b32.xlu0 %v867, 64
    %v891 = vpop.permute.xlu0 %890
    %892 = vrot.lane.b32.xlu0 %v869, 64
    %v893 = vpop.permute.xlu0 %892
    %vm906 = vcmask 64512
    %v907 = vsel %vm906, %v323, %v476
    %v908 = vsel %vm906, %v324, %v478
    %v909 = vsel %vm906, %v325, %v480
    %v910 = vsel %vm906, %v326, %v482
    %v911 = vsel %vm906, %v327, %v484
    %v912 = vsel %vm906, %v328, %v486
    %v913 = vsel %vm906, %v329, %v488
    %v914 = vsel %vm906, %v330, %v490
    %v915 = vsel %vm906, %v331, %v492
    %v916 = vsel %vm906, %v332, %v494
    %v917 = vsel %vm906, %v333, %v496
    %v918 = vsel %vm906, %v334, %v498
    %vm919 = vcmask 130048
    %v920 = vsel %vm919, %v907, %v551
    %v921 = vsel %vm919, %v908, %v553
    %v922 = vsel %vm919, %v909, %v555
    %v923 = vsel %vm919, %v910, %v557
    %v924 = vsel %vm919, %v911, %v559
    %v925 = vsel %vm919, %v912, %v561
    %v926 = vsel %vm919, %v913, %v563
    %v927 = vsel %vm919, %v914, %v565
    %v928 = vsel %vm919, %v915, %v567
    %v929 = vsel %vm919, %v916, %v569
    %v930 = vsel %vm919, %v917, %v571
    %v931 = vsel %vm919, %v918, %v573
    %vm932 = vcmask 195584
    %v933 = vsel %vm932, %v920, %v599
    %v934 = vsel %vm932, %v921, %v601
    %v935 = vsel %vm932, %v922, %v603
    %v936 = vsel %vm932, %v923, %v605
    %v937 = vsel %vm932, %v924, %v607
    %v938 = vsel %vm932, %v925, %v609
    %v939 = vsel %vm932, %v926, %v611
    %v940 = vsel %vm932, %v927, %v613
    %v941 = vsel %vm932, %v928, %v615
    %v942 = vsel %vm932, %v929, %v617
    %v943 = vsel %vm932, %v930, %v619
    %v944 = vsel %vm932, %v931, %v621
    %vm945 = vcmask 261120
    %v946 = vsel %vm945, %v933, %v638
    %v947 = vsel %vm945, %v934, %v640
    %v948 = vsel %vm945, %v935, %v642
    %v949 = vsel %vm945, %v936, %v644
    %v950 = vsel %vm945, %v937, %v646
    %v951 = vsel %vm945, %v938, %v648
    %v952 = vsel %vm945, %v939, %v650
    %v953 = vsel %vm945, %v940, %v652
    %v954 = vsel %vm945, %v941, %v654
    %v955 = vsel %vm945, %v942, %v656
    %v956 = vsel %vm945, %v943, %v658
    %v957 = vsel %vm945, %v944, %v660
    %vm958 = vcmask 326656
    %v959 = vsel %vm958, %v946, %v712
    %v960 = vsel %vm958, %v947, %v714
    %v961 = vsel %vm958, %v948, %v716
    %v962 = vsel %vm958, %v949, %v718
    %v963 = vsel %vm958, %v950, %v720
    %v964 = vsel %vm958, %v951, %v722
    %v965 = vsel %vm958, %v952, %v724
    %v966 = vsel %vm958, %v953, %v726
    %v967 = vsel %vm958, %v954, %v728
    %v968 = vsel %vm958, %v955, %v730
    %v969 = vsel %vm958, %v956, %v732
    %v970 = vsel %vm958, %v957, %v734
    %vm971 = vcmask 392192
    %v972 = vsel %vm971, %v959, %v760
    %v973 = vsel %vm971, %v960, %v762
    %v974 = vsel %vm971, %v961, %v764
    %v975 = vsel %vm971, %v962, %v766
    %v976 = vsel %vm971, %v963, %v768
    %v977 = vsel %vm971, %v964, %v770
    %v978 = vsel %vm971, %v965, %v772
    %v979 = vsel %vm971, %v966, %v774
    %v980 = vsel %vm971, %v967, %v776
    %v981 = vsel %vm971, %v968, %v778
    %v982 = vsel %vm971, %v969, %v780
    %v983 = vsel %vm971, %v970, %v782
    %vm984 = vcmask 457728
    %v985 = vsel %vm984, %v972, %v797
    %v986 = vsel %vm984, %v973, %v799
    %v987 = vsel %vm984, %v974, %v801
    %v988 = vsel %vm984, %v975, %v803
    %v989 = vsel %vm984, %v976, %v805
    %v990 = vsel %vm984, %v977, %v807
    %v991 = vsel %vm984, %v978, %v809
    %v992 = vsel %vm984, %v979, %v811
    %v993 = vsel %vm984, %v980, %v813
    %v994 = vsel %vm984, %v981, %v815
    %v995 = vsel %vm984, %v982, %v817
    %v996 = vsel %vm984, %v983, %v819
    %vm997 = vcmask 523264
    %v998 = vsel %vm997, %v985, %v871
    %v999 = vsel %vm997, %v986, %v873
    %v1000 = vsel %vm997, %v987, %v875
    %v1001 = vsel %vm997, %v988, %v877
    %v1002 = vsel %vm997, %v989, %v879
    %v1003 = vsel %vm997, %v990, %v881
    %v1004 = vsel %vm997, %v991, %v883
    %v1005 = vsel %vm997, %v992, %v885
    %v1006 = vsel %vm997, %v993, %v887
    %v1007 = vsel %vm997, %v994, %v889
    %v1008 = vsel %vm997, %v995, %v891
    %v1009 = vsel %vm997, %v996, %v893
    %v1010 = vpack.c.bf16 %v999, %v998
    %v1011 = vpack.c.bf16 %v1001, %v1000
    %v1012 = vpack.c.bf16 %v1003, %v1002
    %v1013 = vpack.c.bf16 %v1005, %v1004
    %v1014 = vpack.c.bf16 %v1007, %v1006
    %v1015 = vpack.c.bf16 %v1009, %v1008
    %v1016 = vld [vmem:[%s1] sm:$0xf]
    %v1017 = vld [vmem:[%s1 + $0x4] sm:$0xf]
    %v1018 = vld [vmem:[%s1 + $0x8] sm:$0xf]
    %v1019 = vld [vmem:[%s1 + $0xc] sm:$0xf]
    %v1020 = vld [vmem:[%s1 + $0x10] sm:$0xf]
    %v1021 = vld [vmem:[%s1 + $0x14] sm:$0xf]
    %v1022 = vld [vmem:[%s1 + $0x18] sm:$0xf]
    %v1023 = vld [vmem:[%s1 + $0x1c] sm:$0xf]
    %v1024 = vld [vmem:[%s1 + $0x20] sm:$0xf]
    %v1025 = vld [vmem:[%s2] sm:$0x1]
    %v1027 = vlaneseq
    %v1028 = vshrl.u32 %v1027, 7
    %v1029 = vsub.s32 0, %v1028
    %v1030 = vrot.slane %v1025, %v1029
    %v1041 = vunpack.c.l.b16 %v1016
    %v1042 = vunpack.c.l.b16 %v1017
    %v1043 = vunpack.c.l.b16 %v1018
    %v1044 = vunpack.c.l.b16 %v1019
    %v1045 = vunpack.c.l.b16 %v1020
    %v1046 = vunpack.c.l.b16 %v1021
    %v1047 = vunpack.c.l.b16 %v1022
    %v1048 = vunpack.c.l.b16 %v1023
    %v1049 = vunpack.c.l.b16 %v1024
    %v1050 = vpack.c.b16 %v1042, %v1041
    %v1051 = vpack.c.b16 %v1044, %v1043
    %v1052 = vpack.c.b16 %v1046, %v1045
    %v1053 = vpack.c.b16 %v1048, %v1047
    %v1054 = vpack.c.b16 %v1049, %v1049
    %vm1059 = vcmask 588800
    %v1061 = vsel %vm1059, %v1010, 0
    %v1064 = vsel %vm1059, %v1011, 0
    %v1067 = vsel %vm1059, %v1012, 0
    %v1070 = vsel %vm1059, %v1013, 0
    %v1073 = vsel %vm1059, %v1014, 0
    %v1076 = vsel %vm1059, %v1015, 0
    %vm1078 = vcmask 1043456
    %v1080 = vsel %vm1078, %v1054, 0
    %1082 = vmatprep.subr.bf16.mxu0 0
    %1083 = vmatpush1.bf16.msra.mxu0 %v1050
    %1084 = vmatprep.subr.bf16.mxu0 0
    %1085 = vmatpush1.bf16.msra.mxu0 %v1051
    %1086 = vmatprep.subr.bf16.mxu0 0
    %1087 = vmatpush1.bf16.msra.mxu0 %v1052
    %1088 = vmatprep.subr.bf16.mxu0 0
    %1089 = vmatpush1.bf16.msra.mxu0 %v1053
    %1090 = vmatprep.subr.bf16.mxu0 0
    %1091 = vmatpush1.bf16.msra.mxu0 %v1080
    %1092 = vmatprep.subr.bf16.mxu0 0
    %1093 = vmatpush1.bf16.msra.mxu0 0
    %1094 = vmatprep.subr.bf16.mxu0 0
    %1095 = vmatpush1.bf16.msra.mxu0 0
    %1096 = vmatprep.subr.bf16.mxu0 0
    %1097 = vmatpush1.bf16.msra.mxu0 0
    %1098 = vmatprep.subr.bf16.mxu0 0
    %1099 = vmatpush1.bf16.msra.mxu0 0
    %1100 = vmatprep.subr.bf16.mxu0 0
    %1101 = vmatpush1.bf16.msra.mxu0 0
    %1102 = vmatprep.subr.bf16.mxu0 0
    %1103 = vmatpush1.bf16.msra.mxu0 0
    %1104 = vmatprep.subr.bf16.mxu0 0
    %1105 = vmatpush1.bf16.msra.mxu0 0
    %1106 = vmatprep.subr.bf16.mxu0 0
    %1107 = vmatpush1.bf16.msra.mxu0 0
    %1108 = vmatprep.subr.bf16.mxu0 0
    %1109 = vmatpush1.bf16.msra.mxu0 0
    %1110 = vmatprep.subr.bf16.mxu0 0
    %1111 = vmatpush1.bf16.msra.mxu0 0
    %1112 = vmatprep.subr.bf16.mxu0 0
    %1113 = vmatpush1.bf16.msra.mxu0 0
    %1114 = vmatprep.mubr.bf16.mxu0 0
    %1115 = vmatmul.mubr.bf16.gmra.mrb[0].mxu0 %v1061
    %v1116 = vpop.f32.mrb[0].mxu0
    %v1117 = vadd.f32 %v1030, %v1116
    %v1118 = vpop.f32.mrb[0].mxu0
    %v1119 = vpop.f32.mrb[0].mxu0
    %v1120 = vadd.f32 %v1030, %v1119
    %v1121 = vpop.f32.mrb[0].mxu0
    %1122 = vmatprep.mubr.bf16.mxu0 0
    %1123 = vmatmul.mubr.bf16.gmra.mrb[0].mxu0 %v1064
    %v1124 = vpop.f32.mrb[0].mxu0
    %v1125 = vadd.f32 %v1030, %v1124
    %v1126 = vpop.f32.mrb[0].mxu0
    %v1127 = vpop.f32.mrb[0].mxu0
    %v1128 = vadd.f32 %v1030, %v1127
    %v1129 = vpop.f32.mrb[0].mxu0
    %1130 = vmatprep.mubr.bf16.mxu0 0
    %1131 = vmatmul.mubr.bf16.gmra.mrb[0].mxu0 %v1067
    %v1132 = vpop.f32.mrb[0].mxu0
    %v1133 = vadd.f32 %v1030, %v1132
    %v1134 = vpop.f32.mrb[0].mxu0
    %v1135 = vpop.f32.mrb[0].mxu0
    %v1136 = vadd.f32 %v1030, %v1135
    %v1137 = vpop.f32.mrb[0].mxu0
    %1138 = vmatprep.mubr.bf16.mxu0 0
    %1139 = vmatmul.mubr.bf16.gmra.mrb[0].mxu0 %v1070
    %v1140 = vpop.f32.mrb[0].mxu0
    %v1141 = vadd.f32 %v1030, %v1140
    %v1142 = vpop.f32.mrb[0].mxu0
    %v1143 = vpop.f32.mrb[0].mxu0
    %v1144 = vadd.f32 %v1030, %v1143
    %v1145 = vpop.f32.mrb[0].mxu0
    %1146 = vmatprep.mubr.bf16.mxu0 0
    %1147 = vmatmul.mubr.bf16.gmra.mrb[0].mxu0 %v1073
    %v1148 = vpop.f32.mrb[0].mxu0
    %v1149 = vadd.f32 %v1030, %v1148
    %v1150 = vpop.f32.mrb[0].mxu0
    %v1151 = vpop.f32.mrb[0].mxu0
    %v1152 = vadd.f32 %v1030, %v1151
    %v1153 = vpop.f32.mrb[0].mxu0
    %1154 = vmatprep.mubr.bf16.mxu0 0
    %1155 = vmatmul.mubr.bf16.gmra.mrb[0].mxu0 %v1076
    %v1156 = vpop.f32.mrb[0].mxu0
    %v1157 = vadd.f32 %v1030, %v1156
    %v1158 = vpop.f32.mrb[0].mxu0
    %v1159 = vpop.f32.mrb[0].mxu0
    %v1160 = vadd.f32 %v1030, %v1159
    %v1161 = vpop.f32.mrb[0].mxu0
    %1162 = vdwg.mxu0
    %v1163 = vpack.c.bf16 %v1120, %v1117
    %v1164 = vpack.c.bf16 %v1128, %v1125
    %v1165 = vpack.c.bf16 %v1136, %v1133
    %v1166 = vpack.c.bf16 %v1144, %v1141
    %v1167 = vpack.c.bf16 %v1152, %v1149
    %v1168 = vpack.c.bf16 %v1160, %v1157
    %v1175 = vunpack.c.l.b16 %v1163
    %v1176 = vunpack.c.h.b16 %v1163
    %v1177 = vunpack.c.l.b16 %v1164
    %v1178 = vunpack.c.h.b16 %v1164
    %v1179 = vunpack.c.l.b16 %v1165
    %v1180 = vunpack.c.h.b16 %v1165
    %v1181 = vunpack.c.l.b16 %v1166
    %v1182 = vunpack.c.h.b16 %v1166
    %v1183 = vunpack.c.l.b16 %v1167
    %v1184 = vunpack.c.h.b16 %v1167
    %v1185 = vunpack.c.l.b16 %v1168
    %v1186 = vunpack.c.h.b16 %v1168
    %v1187 = vpack.c.b16 %v1175, %v1175
    %v1188 = vpack.c.b16 %v1176, %v1176
    %v1189 = vpack.c.b16 %v1177, %v1177
    %v1190 = vpack.c.b16 %v1178, %v1178
    %v1191 = vpack.c.b16 %v1179, %v1179
    %v1192 = vpack.c.b16 %v1180, %v1180
    %v1193 = vpack.c.b16 %v1181, %v1181
    %v1194 = vpack.c.b16 %v1182, %v1182
    %v1195 = vpack.c.b16 %v1183, %v1183
    %v1196 = vpack.c.b16 %v1184, %v1184
    %v1197 = vpack.c.b16 %v1185, %v1185
    %v1198 = vpack.c.b16 %v1186, %v1186
    %vm1211 = vcmask 125952
    %1212 = vst.msk [vmem:[%s3] sm:$0xf] %vm1211, %v1187
    %1213 = vst.msk [vmem:[%s3 + $0x4] sm:$0xf] %vm1211, %v1188
    %1214 = vst.msk [vmem:[%s3 + $0x8] sm:$0xf] %vm1211, %v1189
    %1215 = vst.msk [vmem:[%s3 + $0xc] sm:$0xf] %vm1211, %v1190
    %1216 = vst.msk [vmem:[%s3 + $0x10] sm:$0xf] %vm1211, %v1191
    %1217 = vst.msk [vmem:[%s3 + $0x14] sm:$0xf] %vm1211, %v1192
    %1218 = vst.msk [vmem:[%s3 + $0x18] sm:$0xf] %vm1211, %v1193
    %1219 = vst.msk [vmem:[%s3 + $0x1c] sm:$0xf] %vm1211, %v1194
    %1220 = vst.msk [vmem:[%s3 + $0x20] sm:$0xf] %vm1211, %v1195
    %1221 = vst.msk [vmem:[%s3 + $0x24] sm:$0xf] %vm1211, %v1196
    %1222 = vst.msk [vmem:[%s3 + $0x28] sm:$0xf] %vm1211, %v1197
    %1223 = vst.msk [vmem:[%s3 + $0x2c] sm:$0xf] %vm1211, %v1198
    %v1224 = vunpack.c.l.bf16 %v1163
    %v1225 = vunpack.c.h.bf16 %v1163
    %v1226 = vunpack.c.l.bf16 %v1164
    %v1227 = vunpack.c.h.bf16 %v1164
    %v1228 = vunpack.c.l.bf16 %v1165
    %v1229 = vunpack.c.h.bf16 %v1165
    %v1230 = vunpack.c.l.bf16 %v1166
    %v1231 = vunpack.c.h.bf16 %v1166
    %v1232 = vunpack.c.l.bf16 %v1167
    %v1233 = vunpack.c.h.bf16 %v1167
    %v1234 = vunpack.c.l.bf16 %v1168
    %v1235 = vunpack.c.h.bf16 %v1168
    %v1236 = vsel %vm919, %v1224, 0.0
    %v1237 = vsel %vm919, %v1225, 0.0
    %v1238 = vadd.f32 %v1236, %v1237
    %v1239 = vsel %vm919, %v1226, 0.0
    %v1240 = vadd.f32 %v1238, %v1239
    %v1241 = vsel %vm919, %v1227, 0.0
    %v1242 = vadd.f32 %v1240, %v1241
    %v1243 = vsel %vm919, %v1228, 0.0
    %v1244 = vadd.f32 %v1242, %v1243
    %v1245 = vsel %vm919, %v1229, 0.0
    %v1246 = vadd.f32 %v1244, %v1245
    %v1247 = vsel %vm919, %v1230, 0.0
    %v1248 = vadd.f32 %v1246, %v1247
    %v1249 = vsel %vm919, %v1231, 0.0
    %v1250 = vadd.f32 %v1248, %v1249
    %v1251 = vsel %vm919, %v1232, 0.0
    %v1252 = vadd.f32 %v1250, %v1251
    %v1253 = vsel %vm919, %v1233, 0.0
    %v1254 = vadd.f32 %v1252, %v1253
    %v1255 = vsel %vm919, %v1234, 0.0
    %v1256 = vadd.f32 %v1254, %v1255
    %v1257 = vsel %vm919, %v1235, 0.0
    %v1258 = vadd.f32 %v1256, %v1257
    %v1259 = vrot.slane %v1258, 4
    %v1260 = vadd.f32 %v1258, %v1259
    %v1261 = vrot.slane %v1260, 2
    %v1262 = vadd.f32 %v1260, %v1261
    %v1263 = vrot.slane %v1262, 1
    %v1264 = vadd.f32 %v1262, %v1263
    %v1265 = vmul.f32 %v1224, %v1224
    %v1266 = vmul.f32 %v1225, %v1225
    %v1267 = vmul.f32 %v1226, %v1226
    %v1268 = vmul.f32 %v1227, %v1227
    %v1269 = vmul.f32 %v1228, %v1228
    %v1270 = vmul.f32 %v1229, %v1229
    %v1271 = vmul.f32 %v1230, %v1230
    %v1272 = vmul.f32 %v1231, %v1231
    %v1273 = vmul.f32 %v1232, %v1232
    %v1274 = vmul.f32 %v1233, %v1233
    %v1275 = vmul.f32 %v1234, %v1234
    %v1276 = vmul.f32 %v1235, %v1235
    %v1277 = vsel %vm919, %v1265, 0.0
    %v1278 = vsel %vm919, %v1266, 0.0
    %v1279 = vadd.f32 %v1277, %v1278
    %v1280 = vsel %vm919, %v1267, 0.0
    %v1281 = vadd.f32 %v1279, %v1280
    %v1282 = vsel %vm919, %v1268, 0.0
    %v1283 = vadd.f32 %v1281, %v1282
    %v1284 = vsel %vm919, %v1269, 0.0
    %v1285 = vadd.f32 %v1283, %v1284
    %v1286 = vsel %vm919, %v1270, 0.0
    %v1287 = vadd.f32 %v1285, %v1286
    %v1288 = vsel %vm919, %v1271, 0.0
    %v1289 = vadd.f32 %v1287, %v1288
    %v1290 = vsel %vm919, %v1272, 0.0
    %v1291 = vadd.f32 %v1289, %v1290
    %v1292 = vsel %vm919, %v1273, 0.0
    %v1293 = vadd.f32 %v1291, %v1292
    %v1294 = vsel %vm919, %v1274, 0.0
    %v1295 = vadd.f32 %v1293, %v1294
    %v1296 = vsel %vm919, %v1275, 0.0
    %v1297 = vadd.f32 %v1295, %v1296
    %v1298 = vsel %vm919, %v1276, 0.0
    %v1299 = vadd.f32 %v1297, %v1298
    %v1300 = vrot.slane %v1299, 4
    %v1301 = vadd.f32 %v1299, %v1300
    %v1302 = vrot.slane %v1301, 2
    %v1303 = vadd.f32 %v1301, %v1302
    %v1304 = vrot.slane %v1303, 1
    %v1305 = vadd.f32 %v1303, %v1304
    %v1306 = vsel %vm55, %v1264, %v1305
    %vm1307 = vcmask 123904
    %1308 = vst.msk [vmem:[#allocation2] sm:$0x3] %vm1307, %v1306
    // Predicated region
    $region14: #{tpu_custom_call.1} parent=1 // pred_check
      _
    $region15: #{tpu_custom_call.1} parent=1 // pred_check_branch
      %1310 = sbr.rel (0) target = $region17
    $region16: #{tpu_custom_call.1} parent=1 // pred_region
      _
    $region17: #{tpu_custom_call.1} parent=1 // pred_fallthru
      _
    // Predicated region
    $region18: #{tpu_custom_call.1} parent=1 // pred_check
      _
    $region19: #{tpu_custom_call.1} parent=1 // pred_check_branch
      %1312 = sbr.rel (0) target = $region21
    $region20: #{tpu_custom_call.1} parent=1 // pred_region
      %s1313 = sadd.s32 0, 0
      %s1315 = ssub.s32 32, 32
      %1316 = vsyncadd [#allocation3], %s1315
      %s1317 = smul.addr %s1313, 32
      %s1318 = scalar_lea.hbm %s4, %s1317
      %s1320 = sshll.u32 [#allocation2], 4
      %s1321 = int_to_ptr.vmem [resolvable:$true] %s1320
      %1323 = dma.vmem_to_hbm [thread:$0]  %s1321, 32, %s1318, [#allocation3]
    $region21: #{tpu_custom_call.1} parent=1 // pred_fallthru
      _
    // Predicated region
    $region22: #{tpu_custom_call.1} parent=1 // pred_check
      _
    $region23: #{tpu_custom_call.1} parent=1 // pred_check_branch
      %1325 = sbr.rel (0) target = $region25
    $region24: #{tpu_custom_call.1} parent=1 // pred_region
      _
    $region25: #{tpu_custom_call.1} parent=1 // pred_fallthru
      _
    // Predicated region
    $region26: #{tpu_custom_call.1} parent=1 // pred_check
      _
    $region27: #{tpu_custom_call.1} parent=1 // pred_check_branch
      %1327 = sbr.rel (0) target = $region29
    $region28: #{tpu_custom_call.1} parent=1 // pred_region
      %1328 = dma.done [#allocation3], 32
    $region29: #{tpu_custom_call.1} parent=1 // pred_fallthru
      _
    %1329 = vsyncpa [#allocation3], 1

</llo_original>
